<compile_context>
chip_gen: v6e
topology: v6e:2x2x1
jax: 0.10.0
libtpu: 0.0.40
codegen_flags: <defaults>
</compile_context>

<pallas_src>
import functools

import jax
import jax.numpy as jnp
from jax import lax
from jax.experimental import pallas as pl
from jax.experimental.pallas import tpu as pltpu


def _cdiv(a, b):
    return -(-a // b)


# ---------------------------------------------------------------------------
# Kernels
# ---------------------------------------------------------------------------

def _excite(pooled, w1, b1, w2, b2):
    """SE excitation MLP on pooled (nb, C) activations (all f32).

    w1: (S, C), b1: (1, S), w2: (C, S), b2: (1, C).  Returns sigmoid gate (nb, C).
    The binding resource of the whole kernel is the HBM stream, so this stays
    simple: for S < 8 use the VPU/XLU (broadcast-multiply + lane reduce) instead
    of nearly-empty MXU matmuls; otherwise batched dot_general on the MXU.
    """
    S = w1.shape[0]
    if S < 8:
        h = jnp.sum(pooled[:, None, :] * w1[None, :, :], axis=-1) + b1   # (nb, S)
        h = h * jax.nn.sigmoid(h)                                        # Swish
        s = jnp.sum(h[:, None, :] * w2[None, :, :], axis=-1) + b2        # (nb, C)
    else:
        h = lax.dot_general(pooled, w1, (((1,), (1,)), ((), ())),
                            preferred_element_type=jnp.float32) + b1     # (nb, S)
        h = h * jax.nn.sigmoid(h)                                        # Swish
        s = lax.dot_general(h, w2, (((1,), (1,)), ((), ())),
                            preferred_element_type=jnp.float32) + b2     # (nb, C)
    return jax.nn.sigmoid(s)                                             # (nb, C)


def se_kernel_3d(x_ref, w1_ref, b1_ref, w2_ref, b2_ref, o_ref):
    """Layout (nb, C, HW).  Used when HW % 128 == 0 (lane-dense stores)."""
    # Pool in f32 (bf16 inputs would lose precision summing over HW).
    pooled = jnp.mean(x_ref[...].astype(jnp.float32), axis=2)            # (nb, C)
    scale = _excite(pooled, w1_ref[...], b1_ref[...], w2_ref[...], b2_ref[...])
    # Store directly from the ref (load*scale fused into the store) so no
    # extra full-size f32 block temporary has to stay live across the block.
    o_ref[...] = (x_ref[...] * scale[:, :, None].astype(o_ref.dtype)).astype(o_ref.dtype)


def _selection_matmul(a, g):
    """a @ g where g is a 0/1 selection matrix (one nonzero per column).

    a is split into a bf16-exact high part plus a small residual so the
    broadcast stays f32-accurate even if the matmul path rounds its operands.
    Both matmuls are tiny relative to the HBM stream.
    """
    a_hi = a.astype(jnp.bfloat16).astype(jnp.float32)
    a_lo = a - a_hi
    dn = (((1,), (0,)), ((), ()))
    return (lax.dot_general(a_hi, g, dn, preferred_element_type=jnp.float32)
            + lax.dot_general(a_lo, g, dn, preferred_element_type=jnp.float32))


def se_kernel_folded(hw, x_ref, g_ref, w1_ref, b1_ref, w2_ref, b2_ref, o_ref):
    """Layout (nb, C*HW): lane-dense path used when HW % 128 != 0.

    g_ref is a (C, C*HW) 0/1 group matrix with g[c, c*HW + j] = 1.  It is used
    both for pooling (x @ g.T / HW) and for broadcasting the per-channel gate
    back to (nb, C*HW) on the MXU, so loads and stores stay dense/unmasked and
    no tile-crossing VMEM reshapes are needed.
    """
    g = g_ref[...]                                                       # (C, CHW) f32
    x32 = x_ref[...].astype(jnp.float32)
    pooled = lax.dot_general(x32, g, (((1,), (1,)), ((), ())),
                             preferred_element_type=jnp.float32) * (1.0 / hw)  # (nb, C)
    scale = _excite(pooled, w1_ref[...], b1_ref[...], w2_ref[...], b2_ref[...])
    scale_full = _selection_matmul(scale, g)                             # (nb, CHW)
    o_ref[...] = (x_ref[...] * scale_full.astype(o_ref.dtype)).astype(o_ref.dtype)


# ---------------------------------------------------------------------------
# Wrapper
# ---------------------------------------------------------------------------

def _vmem_capacity_bytes():
    try:
        return int(pltpu.get_tpu_info().vmem_capacity_bytes)
    except Exception:
        return 128 << 20   # conservative default (v5e/v6e physical VMEM)


def _pick_batch_block(N, per_elem_bytes, target_block_bytes,
                      min_block_bytes=1 << 20, min_grid_steps=4):
    """Batch-block size for the streaming grid.

    Largest nb with nb * per_elem <= target (the cdiv grid handles ragged N,
    so there is no divisor search that can collapse to tiny blocks for prime
    N).  Prefer >= min_grid_steps grid steps (2 per TensorCore on v7x when the
    batch axis is "parallel") so every core keeps double-buffered overlap --
    but only when blocks stay >= ~1 MiB; never shrink an already-small problem
    just to manufacture grid steps.
    """
    nb = min(N, max(1, target_block_bytes // per_elem_bytes))
    if _cdiv(N, nb) < min_grid_steps:
        nb_steps = max(1, _cdiv(N, min_grid_steps))
        if nb_steps * per_elem_bytes >= min_block_bytes:
            nb = nb_steps
    return int(nb)


def se_module(x, w1, b1, w2, b2, *, batch_block=None, donate_x=False):
    """x: (N, C, H, W).  w1: (S, C), b1: (S,), w2: (C, S), b2: (C,).

    Matches PyTorch SEModule.forward:
      y = x * sigmoid(conv1x1_{S->C}(swish(conv1x1_{C->S}(avgpool(x)))))
    Set donate_x=True (when the caller no longer needs x) to alias the output
    onto the input buffer and save an HBM allocation.
    """
    N, C, H, W = x.shape
    S = w1.shape[0]
    HW = H * W
    dtype_bytes = jnp.dtype(x.dtype).itemsize
    per_elem = C * HW * dtype_bytes

    vmem_cap = _vmem_capacity_bytes()
    # Generation-aware block target: ~8 MiB on 128 MiB-VMEM parts (v5e/v6e),
    # ~4 MiB on 64 MiB-VMEM parts (v7x) so double-buffered in+out blocks plus
    # temporaries stay well inside scoped VMEM.
    target_block = (8 << 20) if vmem_cap >= (100 << 20) else (4 << 20)

    if batch_block is None:
        nb = _pick_batch_block(N, per_elem, target_block)
    else:
        nb = int(batch_block)
    nb = max(1, min(nb, N))
    grid_steps = _cdiv(N, nb)          # ragged last block: pad reads only feed
    block_bytes = nb * per_elem        # pad rows; pad writes are masked.

    w1f = w1.astype(jnp.float32)
    w2f = w2.astype(jnp.float32)
    b1_2d = b1.reshape(1, S).astype(jnp.float32)
    b2_2d = b2.reshape(1, C).astype(jnp.float32)

    # ----- lane-dense layout selection -----
    g_resident = C * C * HW * 4
    use_folded = (HW % 128 != 0) and (g_resident <= (8 << 20))
    # TODO(synk): if HW % 128 != 0 and the group matrix is too large (very wide
    # C), we fall back to (N, C, HW) and pay masked partial stores; a spatially
    # chunked grid (pooled accumulator in VMEM scratch + revisit sweep) would
    # also cover that case and give v7x both TensorCores work at N=1.

    if use_folded:
        CHW = C * HW
        x_in = x.reshape(N, CHW)                           # contiguous -> free
        g = jnp.repeat(jnp.eye(C, dtype=jnp.float32), HW, axis=1)   # (C, CHW)
        kernel = functools.partial(se_kernel_folded, HW)
        x_block = (nb, CHW)
        x_imap = lambda n: (n, 0)
        extra_in = [g]
        extra_specs = [pl.BlockSpec((C, CHW), lambda n: (0, 0))]
        out_shape_flat = (N, CHW)
    else:
        x_in = x.reshape(N, C, HW)                         # contiguous -> free
        kernel = se_kernel_3d
        x_block = (nb, C, HW)
        x_imap = lambda n: (n, 0, 0)
        extra_in = []
        extra_specs = []
        out_shape_flat = (N, C, HW)
        g_resident = 0

    # Deeper input buffering only in the small-block multi-step regime where
    # the block transfer no longer hides per-step DMA issue latency.  (At the
    # 4-8 MiB block target this would only waste VMEM, notably on v7x.)
    deep_buffer = (block_bytes < (1 << 20)) and (grid_steps >= 2)
    if deep_buffer:
        try:
            x_spec = pl.BlockSpec(x_block, x_imap, pipeline_mode=pl.Buffered(3))
        except TypeError:  # BlockSpec without pipeline_mode support
            x_spec = pl.BlockSpec(x_block, x_imap)
    else:
        x_spec = pl.BlockSpec(x_block, x_imap)
    out_spec = pl.BlockSpec(x_block, x_imap)

    weight_bytes = 4 * int(w1.size + w2.size + b1.size + b2.size)
    # 2x-in + 2x-out double-buffered blocks + one elementwise/store temp block
    # + double-buffered group matrix & weights + headroom.
    vmem_limit = int(5 * block_bytes + 2 * g_resident + 4 * weight_bytes + (4 << 20))
    vmem_limit = max(vmem_limit, 32 << 20)
    if vmem_cap >= (48 << 20):
        vmem_limit = min(vmem_limit, int(0.9 * vmem_cap))

    cost = pl.CostEstimate(
        flops=int(3 * N * C * HW + 4 * N * C * S
                  + (6 * N * C * HW * C if use_folded else 0)),
        transcendentals=int(N * (C + S)),
        bytes_accessed=int(2 * N * C * HW * dtype_bytes + weight_bytes + g_resident),
    )

    in_arrays = [x_in] + extra_in + [w1f, b1_2d, w2f, b2_2d]
    in_specs = [x_spec] + extra_specs + [
        pl.BlockSpec((S, C), lambda n: (0, 0)),
        pl.BlockSpec((1, S), lambda n: (0, 0)),
        pl.BlockSpec((C, S), lambda n: (0, 0)),
        pl.BlockSpec((1, C), lambda n: (0, 0)),
    ]

    out_flat = pl.pallas_call(
        kernel,
        out_shape=jax.ShapeDtypeStruct(out_shape_flat, x.dtype),
        grid_spec=pltpu.PrefetchScalarGridSpec(
            num_scalar_prefetch=0,
            grid=(grid_steps,),
            in_specs=in_specs,
            out_specs=out_spec,
        ),
        compiler_params=pltpu.CompilerParams(
            dimension_semantics=("parallel",),
            vmem_limit_bytes=vmem_limit,
        ),
        cost_estimate=cost,
        input_output_aliases=({0: 0} if donate_x else {}),
    )(*in_arrays)

    return out_flat.reshape(N, C, H, W)


# ---------------------------------------------------------------------------
# Pure-JAX reference (exact f32 excitation math)
# ---------------------------------------------------------------------------

def se_module_ref(x, w1, b1, w2, b2):
    xf = x.astype(jnp.float32)
    w1f = w1.astype(jnp.float32)
    w2f = w2.astype(jnp.float32)
    b1f = b1.astype(jnp.float32)
    b2f = b2.astype(jnp.float32)
    pooled = jnp.mean(xf, axis=(2, 3))                                   # (N, C)
    h = jnp.sum(pooled[:, None, :] * w1f[None, :, :], axis=-1) + b1f     # (N, S)
    h = h * jax.nn.sigmoid(h)                                            # Swish
    s = jnp.sum(h[:, None, :] * w2f[None, :, :], axis=-1) + b2f          # (N, C)
    scale = jax.nn.sigmoid(s).astype(x.dtype)[:, :, None, None]
    return x * scale


# ---------------------------------------------------------------------------
# Demo / self-test
# ---------------------------------------------------------------------------

if __name__ == "__main__":
    def make_inputs(key, N, C, H, W, reduction=16):
        S = max(1, C // reduction)
        kx, k1, k2, k3, k4 = jax.random.split(key, 5)
        x = jax.random.normal(kx, (N, C, H, W), dtype=jnp.float32)
        w1 = jax.random.normal(k1, (S, C), dtype=jnp.float32) * 0.1   # Conv2d(C,S,1)
        b1 = jax.random.normal(k2, (S,), dtype=jnp.float32) * 0.1
        w2 = jax.random.normal(k3, (C, S), dtype=jnp.float32) * 0.1   # Conv2d(S,C,1)
        b2 = jax.random.normal(k4, (C,), dtype=jnp.float32) * 0.1
        return x, w1, b1, w2, b2

    keys = jax.random.split(jax.random.PRNGKey(0), 4)

    # (name, N, C, H, W, reduction, batch_block_override, donate_x)
    cases = [
        # lane-dense (HW=256), single block, S=8 -> MXU excitation, donated x
        ("lane_dense_mxu_excite_donated", 4, 128, 16, 16, 16, None, True),
        # HW=196 (not a multiple of 128) -> folded lane-dense path, S=2
        ("folded_hw196_single_block",     3,  32, 14, 14, 16, None, False),
        # forced small blocks: ragged cdiv grid + Buffered(3) input pipeline
        ("ragged_grid_small_blocks",     11,  64, 16, 16, 16, 4,    False),
        # HW=49 folded path + ragged grid + deep buffering
        ("folded_hw49_ragged_grid",       5,  64,  7,  7, 16, 2,    False),
    ]

    for i, (name, N, C, H, W, red, bb, donate) in enumerate(cases):
        x, w1, b1, w2, b2 = make_inputs(keys[i], N, C, H, W, red)
        ref = jax.block_until_ready(se_module_ref(x, w1, b1, w2, b2))
        x_arg = (x + 0.0) if donate else x   # donate a private copy of x
        out = jax.block_until_ready(
            se_module(x_arg, w1, b1, w2, b2, batch_block=bb, donate_x=donate))
        assert out.shape == x.shape and out.dtype == x.dtype, name
        assert bool(jnp.allclose(out, ref, atol=2e-4, rtol=2e-4)), (
            f"mismatch vs reference in case {name}")

    print("KERNEL_OK")
</pallas_src>

<mosaic_0001>
module attributes {stable_mosaic.version = 11 : i64} {
  func.func @se_kernel_3d(%arg0: i32, %arg1: memref<4x128x256xf32, #tpu.memory_space<vmem>>, %arg2: memref<8x128xf32, #tpu.memory_space<vmem>>, %arg3: memref<1x8xf32, #tpu.memory_space<vmem>>, %arg4: memref<128x8xf32, #tpu.memory_space<vmem>>, %arg5: memref<1x128xf32, #tpu.memory_space<vmem>>, %arg6: memref<4x128x256xf32, #tpu.memory_space<vmem>>) attributes {dimension_semantics = [#tpu.dimension_semantics<parallel>], iteration_bounds = array<i64: 1>, scalar_prefetch = 0 : i64, scratch_operands = 0 : i64, tpu.core_type = #tpu.core_type<tc>, window_params = [{transform_indices = @transform_0, window_bounds = array<i64: 4, 128, 256>}, {pipeline_mode = #tpu.pipeline_mode<synchronous>, transform_indices = @transform_1, window_bounds = array<i64: 8, 128>}, {pipeline_mode = #tpu.pipeline_mode<synchronous>, transform_indices = @transform_2, window_bounds = array<i64: 1, 8>}, {pipeline_mode = #tpu.pipeline_mode<synchronous>, transform_indices = @transform_3, window_bounds = array<i64: 128, 8>}, {pipeline_mode = #tpu.pipeline_mode<synchronous>, transform_indices = @transform_4, window_bounds = array<i64: 1, 128>}, {transform_indices = @transform_5, window_bounds = array<i64: 4, 128, 256>}]} {
    %c0 = arith.constant 0 : index
    %c0_0 = arith.constant 0 : index
    %c0_1 = arith.constant 0 : index
    %0 = vector.load %arg1[%c0, %c0_0, %c0_1] : memref<4x128x256xf32, #tpu.memory_space<vmem>>, vector<4x128x256xf32>
    %cst = arith.constant dense<0.000000e+00> : vector<4x128xf32>
    %1 = vector.multi_reduction <add>, %0, %cst [2] : vector<4x128x256xf32> to vector<4x128xf32>
    %cst_2 = arith.constant 2.560000e+02 : f32
    %2 = vector.broadcast %cst_2 : f32 to vector<4x128xf32>
    %3 = arith.divf %1, %2 : vector<4x128xf32>
    %c0_3 = arith.constant 0 : index
    %c0_4 = arith.constant 0 : index
    %4 = vector.load %arg2[%c0_3, %c0_4] : memref<8x128xf32, #tpu.memory_space<vmem>>, vector<8x128xf32>
    %c0_5 = arith.constant 0 : index
    %c0_6 = arith.constant 0 : index
    %5 = vector.load %arg3[%c0_5, %c0_6] : memref<1x8xf32, #tpu.memory_space<vmem>>, vector<1x8xf32>
    %c0_7 = arith.constant 0 : index
    %c0_8 = arith.constant 0 : index
    %6 = vector.load %arg4[%c0_7, %c0_8] : memref<128x8xf32, #tpu.memory_space<vmem>>, vector<128x8xf32>
    %c0_9 = arith.constant 0 : index
    %c0_10 = arith.constant 0 : index
    %7 = vector.load %arg5[%c0_9, %c0_10] : memref<1x128xf32, #tpu.memory_space<vmem>>, vector<1x128xf32>
    %cst_11 = arith.constant dense<0.000000e+00> : vector<4x8xf32>
    %8 = tpu.matmul %3, %4, %cst_11 {dimension_numbers = #tpu.dot_dimension_numbers<[1], [1], [0], [0], [0, 0, 1, 0], [], []>} : vector<4x128xf32>, vector<8x128xf32>, vector<4x8xf32> -> vector<4x8xf32>
    %9 = vector.broadcast %5 : vector<1x8xf32> to vector<4x8xf32>
    %10 = arith.addf %8, %9 : vector<4x8xf32>
    %11 = arith.negf %10 : vector<4x8xf32>
    %12 = math.exp %11 : vector<4x8xf32>
    %cst_12 = arith.constant 1.000000e+00 : f32
    %13 = vector.broadcast %cst_12 : f32 to vector<4x8xf32>
    %14 = arith.addf %13, %12 : vector<4x8xf32>
    %15 = arith.divf %13, %14 : vector<4x8xf32>
    %16 = arith.mulf %10, %15 : vector<4x8xf32>
    %cst_13 = arith.constant dense<0.000000e+00> : vector<4x128xf32>
    %17 = tpu.matmul %16, %6, %cst_13 {dimension_numbers = #tpu.dot_dimension_numbers<[1], [1], [0], [0], [0, 0, 1, 0], [], []>} : vector<4x8xf32>, vector<128x8xf32>, vector<4x128xf32> -> vector<4x128xf32>
    %18 = vector.broadcast %7 : vector<1x128xf32> to vector<4x128xf32>
    %19 = arith.addf %17, %18 : vector<4x128xf32>
    %20 = arith.negf %19 : vector<4x128xf32>
    %21 = math.exp %20 : vector<4x128xf32>
    %cst_14 = arith.constant 1.000000e+00 : f32
    %22 = vector.broadcast %cst_14 : f32 to vector<4x128xf32>
    %23 = arith.addf %22, %21 : vector<4x128xf32>
    %24 = arith.divf %22, %23 : vector<4x128xf32>
    %c0_15 = arith.constant 0 : index
    %c0_16 = arith.constant 0 : index
    %c0_17 = arith.constant 0 : index
    %25 = vector.load %arg1[%c0_15, %c0_16, %c0_17] : memref<4x128x256xf32, #tpu.memory_space<vmem>>, vector<4x128x256xf32>
    %26 = vector.shape_cast %24 : vector<4x128xf32> to vector<4x128x1xf32>
    %27 = vector.broadcast %26 : vector<4x128x1xf32> to vector<4x128x256xf32>
    %28 = arith.mulf %25, %27 : vector<4x128x256xf32>
    %c0_18 = arith.constant 0 : index
    %c0_19 = arith.constant 0 : index
    %c0_20 = arith.constant 0 : index
    %29 = vector.load %arg6[%c0_18, %c0_19, %c0_20] : memref<4x128x256xf32, #tpu.memory_space<vmem>>, vector<4x128x256xf32>
    tpu.vector_store %arg6[%c0_18, %c0_19, %c0_20], %28 {strides = array<i32>} : memref<4x128x256xf32, #tpu.memory_space<vmem>>, vector<4x128x256xf32>,
    return
  }
  func.func @transform_0(%arg0: i32) -> (i32, i32, i32) {
    %c0_i32 = arith.constant 0 : i32
    %c0_i32_0 = arith.constant 0 : i32
    %c0_i32_1 = arith.constant 0 : i32
    return %arg0, %c0_i32, %c0_i32_0 : i32, i32, i32
  }
  func.func @transform_1(%arg0: i32) -> (i32, i32) {
    %c0_i32 = arith.constant 0 : i32
    %c0_i32_0 = arith.constant 0 : i32
    %c0_i32_1 = arith.constant 0 : i32
    return %c0_i32, %c0_i32_0 : i32, i32
  }
  func.func @transform_2(%arg0: i32) -> (i32, i32) {
    %c0_i32 = arith.constant 0 : i32
    %c0_i32_0 = arith.constant 0 : i32
    %c0_i32_1 = arith.constant 0 : i32
    return %c0_i32, %c0_i32_0 : i32, i32
  }
  func.func @transform_3(%arg0: i32) -> (i32, i32) {
    %c0_i32 = arith.constant 0 : i32
    %c0_i32_0 = arith.constant 0 : i32
    %c0_i32_1 = arith.constant 0 : i32
    return %c0_i32, %c0_i32_0 : i32, i32
  }
  func.func @transform_4(%arg0: i32) -> (i32, i32) {
    %c0_i32 = arith.constant 0 : i32
    %c0_i32_0 = arith.constant 0 : i32
    %c0_i32_1 = arith.constant 0 : i32
    return %c0_i32, %c0_i32_0 : i32, i32
  }
  func.func @transform_5(%arg0: i32) -> (i32, i32, i32) {
    %c0_i32 = arith.constant 0 : i32
    %c0_i32_0 = arith.constant 0 : i32
    %c0_i32_1 = arith.constant 0 : i32
    return %arg0, %c0_i32, %c0_i32_0 : i32, i32, i32
  }
}

</mosaic_0001>

<llo_original>
// kernel: tpu_custom_call.1
$region0: #{tpu_custom_call.1}
  #allocation0 [shape = 'u32[]', space=smem, size = 0x4, offset = 0x4, fixed_abs, tag = 'smem constant byte address 0x4 - core index']
  #allocation1 [shape = 'u32[144,128]{1,0:T(1,128)}', space=vmem, size = 0x12000, scoped, tag = 'internal scratch']
  %s0 = inlined_call_operand.hbm [shape: f32[4,128,256], index: 0, kind: input, shape index: {}, may-alias: {0,5}]
  %s1 = inlined_call_operand.vmem [shape: f32[8,128], index: 1, kind: input, shape index: {}]
  %s2 = inlined_call_operand.vmem [shape: f32[1,8], index: 2, kind: input, shape index: {}]
  %s3 = inlined_call_operand.vmem [shape: f32[128,8], index: 3, kind: input, shape index: {}]
  %s4 = inlined_call_operand.vmem [shape: f32[1,128], index: 4, kind: input, shape index: {}]
  %s5 = inlined_call_operand.hbm [shape: f32[4,128,256], index: 5, kind: output, shape index: {}, may-alias: {0,5}]
  %s6 = sld [smem:[#allocation0]]
  $region34: #{tpu_custom_call.1} parent=0
    _
  %s8 = ssub.s32 1, %s6
  %s9 = scalar_select 0, %s8, %s6
  $region1: #{tpu_custom_call.1} parent=0
    #allocation2 [shape = 'u8[524288]{0}', space=vmem, size = 0x80000, scoped, tag = 'input window, operand 0, single buffered']
    #allocation3 [shape = 's32[1]{0}', space=sflag, size = 0x4, scoped, tag = 'scoped memory for tpu_custom_call.1']
    #allocation4 [shape = 's32[1]{0}', space=sflag, size = 0x4, scoped, tag = 'scoped memory for tpu_custom_call.1']
    #allocation5 [shape = 'u8[524288]{0}', space=vmem, size = 0x80000, scoped, tag = 'output window, operand 0, single buffered']
    %10 = vsyncpa [#allocation3], 0
    %11 = vsyncpa [#allocation4], 0
    // Predicated region
    $region2: #{tpu_custom_call.1} parent=1 // pred_check
      _
    $region3: #{tpu_custom_call.1} parent=1 // pred_check_branch
      %13 = sbr.rel (0) target = $region5
    $region4: #{tpu_custom_call.1} parent=1 // pred_region
      %s15 = ssub.s32 16384, 16384
      %16 = vsyncadd [#allocation3], %s15
      %s17 = sshll.u32 [#allocation2], 4
      %s18 = int_to_ptr.vmem [resolvable:$true] %s17
      %23 = dma.hbm_to_vmem [thread:$0]  %s0, 16384, %s18, [#allocation3], 256, 256, 16
    $region5: #{tpu_custom_call.1} parent=1 // pred_fallthru
      _
    // Predicated region
    $region6: #{tpu_custom_call.1} parent=1 // pred_check
      _
    $region7: #{tpu_custom_call.1} parent=1 // pred_check_branch
      %25 = sbr.rel (0) target = $region9
    $region8: #{tpu_custom_call.1} parent=1 // pred_region
      _
    $region9: #{tpu_custom_call.1} parent=1 // pred_fallthru
      _
    // Predicated region
    $region10: #{tpu_custom_call.1} parent=1 // pred_check
      _
    $region11: #{tpu_custom_call.1} parent=1 // pred_check_branch
      %27 = sbr.rel (0) target = $region13
    $region12: #{tpu_custom_call.1} parent=1 // pred_region
      _
    $region13: #{tpu_custom_call.1} parent=1 // pred_fallthru
      _
    // Predicated region
    $region14: #{tpu_custom_call.1} parent=1 // pred_check
      _
    $region15: #{tpu_custom_call.1} parent=1 // pred_check_branch
      %29 = sbr.rel (0) target = $region17
    $region16: #{tpu_custom_call.1} parent=1 // pred_region
      _
    $region17: #{tpu_custom_call.1} parent=1 // pred_fallthru
      _
    // Predicated region
    $region18: #{tpu_custom_call.1} parent=1 // pred_check
      _
    $region19: #{tpu_custom_call.1} parent=1 // pred_check_branch
      %31 = sbr.rel (0) target = $region21
    $region20: #{tpu_custom_call.1} parent=1 // pred_region
      _
    $region21: #{tpu_custom_call.1} parent=1 // pred_fallthru
      _
    // Predicated region
    $region22: #{tpu_custom_call.1} parent=1 // pred_check
      _
    $region23: #{tpu_custom_call.1} parent=1 // pred_check_branch
      %33 = sbr.rel (0) target = $region25
    $region24: #{tpu_custom_call.1} parent=1 // pred_region
      %34 = dma.done [#allocation3], 16384
    $region25: #{tpu_custom_call.1} parent=1 // pred_fallthru
      _
    %v35 = vld [vmem:[#allocation2] sm:$0xff]
    %v36 = vld [vmem:[#allocation2 + $0x8] sm:$0xff]
    %v37 = vld [vmem:[#allocation2 + $0x10] sm:$0xff]
    %v38 = vld [vmem:[#allocation2 + $0x18] sm:$0xff]
    %v39 = vld [vmem:[#allocation2 + $0x20] sm:$0xff]
    %v40 = vld [vmem:[#allocation2 + $0x28] sm:$0xff]
    %v41 = vld [vmem:[#allocation2 + $0x30] sm:$0xff]
    %v42 = vld [vmem:[#allocation2 + $0x38] sm:$0xff]
    %v43 = vld [vmem:[#allocation2 + $0x40] sm:$0xff]
    %v44 = vld [vmem:[#allocation2 + $0x48] sm:$0xff]
    %v45 = vld [vmem:[#allocation2 + $0x50] sm:$0xff]
    %v46 = vld [vmem:[#allocation2 + $0x58] sm:$0xff]
    %v47 = vld [vmem:[#allocation2 + $0x60] sm:$0xff]
    %v48 = vld [vmem:[#allocation2 + $0x68] sm:$0xff]
    %v49 = vld [vmem:[#allocation2 + $0x70] sm:$0xff]
    %v50 = vld [vmem:[#allocation2 + $0x78] sm:$0xff]
    %v51 = vld [vmem:[#allocation2 + $0x80] sm:$0xff]
    %v52 = vld [vmem:[#allocation2 + $0x88] sm:$0xff]
    %v53 = vld [vmem:[#allocation2 + $0x90] sm:$0xff]
    %v54 = vld [vmem:[#allocation2 + $0x98] sm:$0xff]
    %v55 = vld [vmem:[#allocation2 + $0xa0] sm:$0xff]
    %v56 = vld [vmem:[#allocation2 + $0xa8] sm:$0xff]
    %v57 = vld [vmem:[#allocation2 + $0xb0] sm:$0xff]
    %v58 = vld [vmem:[#allocation2 + $0xb8] sm:$0xff]
    %v59 = vld [vmem:[#allocation2 + $0xc0] sm:$0xff]
    %v60 = vld [vmem:[#allocation2 + $0xc8] sm:$0xff]
    %v61 = vld [vmem:[#allocation2 + $0xd0] sm:$0xff]
    %v62 = vld [vmem:[#allocation2 + $0xd8] sm:$0xff]
    %v63 = vld [vmem:[#allocation2 + $0xe0] sm:$0xff]
    %v64 = vld [vmem:[#allocation2 + $0xe8] sm:$0xff]
    %v65 = vld [vmem:[#allocation2 + $0xf0] sm:$0xff]
    %v66 = vld [vmem:[#allocation2 + $0xf8] sm:$0xff]
    %v67 = vld [vmem:[#allocation2 + $0x100] sm:$0xff]
    %v68 = vld [vmem:[#allocation2 + $0x108] sm:$0xff]
    %v69 = vld [vmem:[#allocation2 + $0x110] sm:$0xff]
    %v70 = vld [vmem:[#allocation2 + $0x118] sm:$0xff]
    %v71 = vld [vmem:[#allocation2 + $0x120] sm:$0xff]
    %v72 = vld [vmem:[#allocation2 + $0x128] sm:$0xff]
    %v73 = vld [vmem:[#allocation2 + $0x130] sm:$0xff]
    %v74 = vld [vmem:[#allocation2 + $0x138] sm:$0xff]
    %v75 = vld [vmem:[#allocation2 + $0x140] sm:$0xff]
    %v76 = vld [vmem:[#allocation2 + $0x148] sm:$0xff]
    %v77 = vld [vmem:[#allocation2 + $0x150] sm:$0xff]
    %v78 = vld [vmem:[#allocation2 + $0x158] sm:$0xff]
    %v79 = vld [vmem:[#allocation2 + $0x160] sm:$0xff]
    %v80 = vld [vmem:[#allocation2 + $0x168] sm:$0xff]
    %v81 = vld [vmem:[#allocation2 + $0x170] sm:$0xff]
    %v82 = vld [vmem:[#allocation2 + $0x178] sm:$0xff]
    %v83 = vld [vmem:[#allocation2 + $0x180] sm:$0xff]
    %v84 = vld [vmem:[#allocation2 + $0x188] sm:$0xff]
    %v85 = vld [vmem:[#allocation2 + $0x190] sm:$0xff]
    %v86 = vld [vmem:[#allocation2 + $0x198] sm:$0xff]
    %v87 = vld [vmem:[#allocation2 + $0x1a0] sm:$0xff]
    %v88 = vld [vmem:[#allocation2 + $0x1a8] sm:$0xff]
    %v89 = vld [vmem:[#allocation2 + $0x1b0] sm:$0xff]
    %v90 = vld [vmem:[#allocation2 + $0x1b8] sm:$0xff]
    %v91 = vld [vmem:[#allocation2 + $0x1c0] sm:$0xff]
    %v92 = vld [vmem:[#allocation2 + $0x1c8] sm:$0xff]
    %v93 = vld [vmem:[#allocation2 + $0x1d0] sm:$0xff]
    %v94 = vld [vmem:[#allocation2 + $0x1d8] sm:$0xff]
    %v95 = vld [vmem:[#allocation2 + $0x1e0] sm:$0xff]
    %v96 = vld [vmem:[#allocation2 + $0x1e8] sm:$0xff]
    %v97 = vld [vmem:[#allocation2 + $0x1f0] sm:$0xff]
    %v98 = vld [vmem:[#allocation2 + $0x1f8] sm:$0xff]
    %v99 = vld [vmem:[#allocation2 + $0x200] sm:$0xff]
    %v100 = vld [vmem:[#allocation2 + $0x208] sm:$0xff]
    %v101 = vld [vmem:[#allocation2 + $0x210] sm:$0xff]
    %v102 = vld [vmem:[#allocation2 + $0x218] sm:$0xff]
    %v103 = vld [vmem:[#allocation2 + $0x220] sm:$0xff]
    %v104 = vld [vmem:[#allocation2 + $0x228] sm:$0xff]
    %v105 = vld [vmem:[#allocation2 + $0x230] sm:$0xff]
    %v106 = vld [vmem:[#allocation2 + $0x238] sm:$0xff]
    %v107 = vld [vmem:[#allocation2 + $0x240] sm:$0xff]
    %v108 = vld [vmem:[#allocation2 + $0x248] sm:$0xff]
    %v109 = vld [vmem:[#allocation2 + $0x250] sm:$0xff]
    %v110 = vld [vmem:[#allocation2 + $0x258] sm:$0xff]
    %v111 = vld [vmem:[#allocation2 + $0x260] sm:$0xff]
    %v112 = vld [vmem:[#allocation2 + $0x268] sm:$0xff]
    %v113 = vld [vmem:[#allocation2 + $0x270] sm:$0xff]
    %v114 = vld [vmem:[#allocation2 + $0x278] sm:$0xff]
    %v115 = vld [vmem:[#allocation2 + $0x280] sm:$0xff]
    %v116 = vld [vmem:[#allocation2 + $0x288] sm:$0xff]
    %v117 = vld [vmem:[#allocation2 + $0x290] sm:$0xff]
    %v118 = vld [vmem:[#allocation2 + $0x298] sm:$0xff]
    %v119 = vld [vmem:[#allocation2 + $0x2a0] sm:$0xff]
    %v120 = vld [vmem:[#allocation2 + $0x2a8] sm:$0xff]
    %v121 = vld [vmem:[#allocation2 + $0x2b0] sm:$0xff]
    %v122 = vld [vmem:[#allocation2 + $0x2b8] sm:$0xff]
    %v123 = vld [vmem:[#allocation2 + $0x2c0] sm:$0xff]
    %v124 = vld [vmem:[#allocation2 + $0x2c8] sm:$0xff]
    %v125 = vld [vmem:[#allocation2 + $0x2d0] sm:$0xff]
    %v126 = vld [vmem:[#allocation2 + $0x2d8] sm:$0xff]
    %v127 = vld [vmem:[#allocation2 + $0x2e0] sm:$0xff]
    %v128 = vld [vmem:[#allocation2 + $0x2e8] sm:$0xff]
    %v129 = vld [vmem:[#allocation2 + $0x2f0] sm:$0xff]
    %v130 = vld [vmem:[#allocation2 + $0x2f8] sm:$0xff]
    %v131 = vld [vmem:[#allocation2 + $0x300] sm:$0xff]
    %v132 = vld [vmem:[#allocation2 + $0x308] sm:$0xff]
    %v133 = vld [vmem:[#allocation2 + $0x310] sm:$0xff]
    %v134 = vld [vmem:[#allocation2 + $0x318] sm:$0xff]
    %v135 = vld [vmem:[#allocation2 + $0x320] sm:$0xff]
    %v136 = vld [vmem:[#allocation2 + $0x328] sm:$0xff]
    %v137 = vld [vmem:[#allocation2 + $0x330] sm:$0xff]
    %v138 = vld [vmem:[#allocation2 + $0x338] sm:$0xff]
    %v139 = vld [vmem:[#allocation2 + $0x340] sm:$0xff]
    %v140 = vld [vmem:[#allocation2 + $0x348] sm:$0xff]
    %v141 = vld [vmem:[#allocation2 + $0x350] sm:$0xff]
    %v142 = vld [vmem:[#allocation2 + $0x358] sm:$0xff]
    %v143 = vld [vmem:[#allocation2 + $0x360] sm:$0xff]
    %v144 = vld [vmem:[#allocation2 + $0x368] sm:$0xff]
    %v145 = vld [vmem:[#allocation2 + $0x370] sm:$0xff]
    %v146 = vld [vmem:[#allocation2 + $0x378] sm:$0xff]
    %v147 = vld [vmem:[#allocation2 + $0x380] sm:$0xff]
    %v148 = vld [vmem:[#allocation2 + $0x388] sm:$0xff]
    %v149 = vld [vmem:[#allocation2 + $0x390] sm:$0xff]
    %v150 = vld [vmem:[#allocation2 + $0x398] sm:$0xff]
    %v151 = vld [vmem:[#allocation2 + $0x3a0] sm:$0xff]
    %v152 = vld [vmem:[#allocation2 + $0x3a8] sm:$0xff]
    %v153 = vld [vmem:[#allocation2 + $0x3b0] sm:$0xff]
    %v154 = vld [vmem:[#allocation2 + $0x3b8] sm:$0xff]
    %v155 = vld [vmem:[#allocation2 + $0x3c0] sm:$0xff]
    %v156 = vld [vmem:[#allocation2 + $0x3c8] sm:$0xff]
    %v157 = vld [vmem:[#allocation2 + $0x3d0] sm:$0xff]
    %v158 = vld [vmem:[#allocation2 + $0x3d8] sm:$0xff]
    %v159 = vld [vmem:[#allocation2 + $0x3e0] sm:$0xff]
    %v160 = vld [vmem:[#allocation2 + $0x3e8] sm:$0xff]
    %v161 = vld [vmem:[#allocation2 + $0x3f0] sm:$0xff]
    %v162 = vld [vmem:[#allocation2 + $0x3f8] sm:$0xff]
    %v163 = vadd.f32 %v35, %v36
    %164 = vadd.xlane.f32.xlu0 %v163
    %v165 = vpop.xlane.xlu0 %164
    %v166 = vadd.f32 %v37, %v38
    %167 = vadd.xlane.f32.xlu0 %v166
    %v168 = vpop.xlane.xlu0 %167
    %v169 = vadd.f32 %v39, %v40
    %170 = vadd.xlane.f32.xlu0 %v169
    %v171 = vpop.xlane.xlu0 %170
    %v172 = vadd.f32 %v41, %v42
    %173 = vadd.xlane.f32.xlu0 %v172
    %v174 = vpop.xlane.xlu0 %173
    %v175 = vadd.f32 %v43, %v44
    %176 = vadd.xlane.f32.xlu0 %v175
    %v177 = vpop.xlane.xlu0 %176
    %v178 = vadd.f32 %v45, %v46
    %179 = vadd.xlane.f32.xlu0 %v178
    %v180 = vpop.xlane.xlu0 %179
    %v181 = vadd.f32 %v47, %v48
    %182 = vadd.xlane.f32.xlu0 %v181
    %v183 = vpop.xlane.xlu0 %182
    %v184 = vadd.f32 %v49, %v50
    %185 = vadd.xlane.f32.xlu0 %v184
    %v186 = vpop.xlane.xlu0 %185
    %v187 = vadd.f32 %v51, %v52
    %188 = vadd.xlane.f32.xlu0 %v187
    %v189 = vpop.xlane.xlu0 %188
    %v190 = vadd.f32 %v53, %v54
    %191 = vadd.xlane.f32.xlu0 %v190
    %v192 = vpop.xlane.xlu0 %191
    %v193 = vadd.f32 %v55, %v56
    %194 = vadd.xlane.f32.xlu0 %v193
    %v195 = vpop.xlane.xlu0 %194
    %v196 = vadd.f32 %v57, %v58
    %197 = vadd.xlane.f32.xlu0 %v196
    %v198 = vpop.xlane.xlu0 %197
    %v199 = vadd.f32 %v59, %v60
    %200 = vadd.xlane.f32.xlu0 %v199
    %v201 = vpop.xlane.xlu0 %200
    %v202 = vadd.f32 %v61, %v62
    %203 = vadd.xlane.f32.xlu0 %v202
    %v204 = vpop.xlane.xlu0 %203
    %v205 = vadd.f32 %v63, %v64
    %206 = vadd.xlane.f32.xlu0 %v205
    %v207 = vpop.xlane.xlu0 %206
    %v208 = vadd.f32 %v65, %v66
    %209 = vadd.xlane.f32.xlu0 %v208
    %v210 = vpop.xlane.xlu0 %209
    %v211 = vadd.f32 %v67, %v68
    %212 = vadd.xlane.f32.xlu0 %v211
    %v213 = vpop.xlane.xlu0 %212
    %v214 = vadd.f32 %v69, %v70
    %215 = vadd.xlane.f32.xlu0 %v214
    %v216 = vpop.xlane.xlu0 %215
    %v217 = vadd.f32 %v71, %v72
    %218 = vadd.xlane.f32.xlu0 %v217
    %v219 = vpop.xlane.xlu0 %218
    %v220 = vadd.f32 %v73, %v74
    %221 = vadd.xlane.f32.xlu0 %v220
    %v222 = vpop.xlane.xlu0 %221
    %v223 = vadd.f32 %v75, %v76
    %224 = vadd.xlane.f32.xlu0 %v223
    %v225 = vpop.xlane.xlu0 %224
    %v226 = vadd.f32 %v77, %v78
    %227 = vadd.xlane.f32.xlu0 %v226
    %v228 = vpop.xlane.xlu0 %227
    %v229 = vadd.f32 %v79, %v80
    %230 = vadd.xlane.f32.xlu0 %v229
    %v231 = vpop.xlane.xlu0 %230
    %v232 = vadd.f32 %v81, %v82
    %233 = vadd.xlane.f32.xlu0 %v232
    %v234 = vpop.xlane.xlu0 %233
    %v235 = vadd.f32 %v83, %v84
    %236 = vadd.xlane.f32.xlu0 %v235
    %v237 = vpop.xlane.xlu0 %236
    %v238 = vadd.f32 %v85, %v86
    %239 = vadd.xlane.f32.xlu0 %v238
    %v240 = vpop.xlane.xlu0 %239
    %v241 = vadd.f32 %v87, %v88
    %242 = vadd.xlane.f32.xlu0 %v241
    %v243 = vpop.xlane.xlu0 %242
    %v244 = vadd.f32 %v89, %v90
    %245 = vadd.xlane.f32.xlu0 %v244
    %v246 = vpop.xlane.xlu0 %245
    %v247 = vadd.f32 %v91, %v92
    %248 = vadd.xlane.f32.xlu0 %v247
    %v249 = vpop.xlane.xlu0 %248
    %v250 = vadd.f32 %v93, %v94
    %251 = vadd.xlane.f32.xlu0 %v250
    %v252 = vpop.xlane.xlu0 %251
    %v253 = vadd.f32 %v95, %v96
    %254 = vadd.xlane.f32.xlu0 %v253
    %v255 = vpop.xlane.xlu0 %254
    %v256 = vadd.f32 %v97, %v98
    %257 = vadd.xlane.f32.xlu0 %v256
    %v258 = vpop.xlane.xlu0 %257
    %v259 = vadd.f32 %v99, %v100
    %260 = vadd.xlane.f32.xlu0 %v259
    %v261 = vpop.xlane.xlu0 %260
    %v262 = vadd.f32 %v101, %v102
    %263 = vadd.xlane.f32.xlu0 %v262
    %v264 = vpop.xlane.xlu0 %263
    %v265 = vadd.f32 %v103, %v104
    %266 = vadd.xlane.f32.xlu0 %v265
    %v267 = vpop.xlane.xlu0 %266
    %v268 = vadd.f32 %v105, %v106
    %269 = vadd.xlane.f32.xlu0 %v268
    %v270 = vpop.xlane.xlu0 %269
    %v271 = vadd.f32 %v107, %v108
    %272 = vadd.xlane.f32.xlu0 %v271
    %v273 = vpop.xlane.xlu0 %272
    %v274 = vadd.f32 %v109, %v110
    %275 = vadd.xlane.f32.xlu0 %v274
    %v276 = vpop.xlane.xlu0 %275
    %v277 = vadd.f32 %v111, %v112
    %278 = vadd.xlane.f32.xlu0 %v277
    %v279 = vpop.xlane.xlu0 %278
    %v280 = vadd.f32 %v113, %v114
    %281 = vadd.xlane.f32.xlu0 %v280
    %v282 = vpop.xlane.xlu0 %281
    %v283 = vadd.f32 %v115, %v116
    %284 = vadd.xlane.f32.xlu0 %v283
    %v285 = vpop.xlane.xlu0 %284
    %v286 = vadd.f32 %v117, %v118
    %287 = vadd.xlane.f32.xlu0 %v286
    %v288 = vpop.xlane.xlu0 %287
    %v289 = vadd.f32 %v119, %v120
    %290 = vadd.xlane.f32.xlu0 %v289
    %v291 = vpop.xlane.xlu0 %290
    %v292 = vadd.f32 %v121, %v122
    %293 = vadd.xlane.f32.xlu0 %v292
    %v294 = vpop.xlane.xlu0 %293
    %v295 = vadd.f32 %v123, %v124
    %296 = vadd.xlane.f32.xlu0 %v295
    %v297 = vpop.xlane.xlu0 %296
    %v298 = vadd.f32 %v125, %v126
    %299 = vadd.xlane.f32.xlu0 %v298
    %v300 = vpop.xlane.xlu0 %299
    %v301 = vadd.f32 %v127, %v128
    %302 = vadd.xlane.f32.xlu0 %v301
    %v303 = vpop.xlane.xlu0 %302
    %v304 = vadd.f32 %v129, %v130
    %305 = vadd.xlane.f32.xlu0 %v304
    %v306 = vpop.xlane.xlu0 %305
    %v307 = vadd.f32 %v131, %v132
    %308 = vadd.xlane.f32.xlu0 %v307
    %v309 = vpop.xlane.xlu0 %308
    %v310 = vadd.f32 %v133, %v134
    %311 = vadd.xlane.f32.xlu0 %v310
    %v312 = vpop.xlane.xlu0 %311
    %v313 = vadd.f32 %v135, %v136
    %314 = vadd.xlane.f32.xlu0 %v313
    %v315 = vpop.xlane.xlu0 %314
    %v316 = vadd.f32 %v137, %v138
    %317 = vadd.xlane.f32.xlu0 %v316
    %v318 = vpop.xlane.xlu0 %317
    %v319 = vadd.f32 %v139, %v140
    %320 = vadd.xlane.f32.xlu0 %v319
    %v321 = vpop.xlane.xlu0 %320
    %v322 = vadd.f32 %v141, %v142
    %323 = vadd.xlane.f32.xlu0 %v322
    %v324 = vpop.xlane.xlu0 %323
    %v325 = vadd.f32 %v143, %v144
    %326 = vadd.xlane.f32.xlu0 %v325
    %v327 = vpop.xlane.xlu0 %326
    %v328 = vadd.f32 %v145, %v146
    %329 = vadd.xlane.f32.xlu0 %v328
    %v330 = vpop.xlane.xlu0 %329
    %v331 = vadd.f32 %v147, %v148
    %332 = vadd.xlane.f32.xlu0 %v331
    %v333 = vpop.xlane.xlu0 %332
    %v334 = vadd.f32 %v149, %v150
    %335 = vadd.xlane.f32.xlu0 %v334
    %v336 = vpop.xlane.xlu0 %335
    %v337 = vadd.f32 %v151, %v152
    %338 = vadd.xlane.f32.xlu0 %v337
    %v339 = vpop.xlane.xlu0 %338
    %v340 = vadd.f32 %v153, %v154
    %341 = vadd.xlane.f32.xlu0 %v340
    %v342 = vpop.xlane.xlu0 %341
    %v343 = vadd.f32 %v155, %v156
    %344 = vadd.xlane.f32.xlu0 %v343
    %v345 = vpop.xlane.xlu0 %344
    %v346 = vadd.f32 %v157, %v158
    %347 = vadd.xlane.f32.xlu0 %v346
    %v348 = vpop.xlane.xlu0 %347
    %v349 = vadd.f32 %v159, %v160
    %350 = vadd.xlane.f32.xlu0 %v349
    %v351 = vpop.xlane.xlu0 %350
    %v352 = vadd.f32 %v161, %v162
    %353 = vadd.xlane.f32.xlu0 %v352
    %v354 = vpop.xlane.xlu0 %353
    %v355 = vrcp.pop 256.0
    %v356 = vmul.f32 %v165, %v355
    %v357 = vmul.f32 %v168, %v355
    %v358 = vmul.f32 %v171, %v355
    %v359 = vmul.f32 %v174, %v355
    %v360 = vmul.f32 %v177, %v355
    %v361 = vmul.f32 %v180, %v355
    %v362 = vmul.f32 %v183, %v355
    %v363 = vmul.f32 %v186, %v355
    %v364 = vmul.f32 %v189, %v355
    %v365 = vmul.f32 %v192, %v355
    %v366 = vmul.f32 %v195, %v355
    %v367 = vmul.f32 %v198, %v355
    %v368 = vmul.f32 %v201, %v355
    %v369 = vmul.f32 %v204, %v355
    %v370 = vmul.f32 %v207, %v355
    %v371 = vmul.f32 %v210, %v355
    %v372 = vmul.f32 %v213, %v355
    %v373 = vmul.f32 %v216, %v355
    %v374 = vmul.f32 %v219, %v355
    %v375 = vmul.f32 %v222, %v355
    %v376 = vmul.f32 %v225, %v355
    %v377 = vmul.f32 %v228, %v355
    %v378 = vmul.f32 %v231, %v355
    %v379 = vmul.f32 %v234, %v355
    %v380 = vmul.f32 %v237, %v355
    %v381 = vmul.f32 %v240, %v355
    %v382 = vmul.f32 %v243, %v355
    %v383 = vmul.f32 %v246, %v355
    %v384 = vmul.f32 %v249, %v355
    %v385 = vmul.f32 %v252, %v355
    %v386 = vmul.f32 %v255, %v355
    %v387 = vmul.f32 %v258, %v355
    %v388 = vmul.f32 %v261, %v355
    %v389 = vmul.f32 %v264, %v355
    %v390 = vmul.f32 %v267, %v355
    %v391 = vmul.f32 %v270, %v355
    %v392 = vmul.f32 %v273, %v355
    %v393 = vmul.f32 %v276, %v355
    %v394 = vmul.f32 %v279, %v355
    %v395 = vmul.f32 %v282, %v355
    %v396 = vmul.f32 %v285, %v355
    %v397 = vmul.f32 %v288, %v355
    %v398 = vmul.f32 %v291, %v355
    %v399 = vmul.f32 %v294, %v355
    %v400 = vmul.f32 %v297, %v355
    %v401 = vmul.f32 %v300, %v355
    %v402 = vmul.f32 %v303, %v355
    %v403 = vmul.f32 %v306, %v355
    %v404 = vmul.f32 %v309, %v355
    %v405 = vmul.f32 %v312, %v355
    %v406 = vmul.f32 %v315, %v355
    %v407 = vmul.f32 %v318, %v355
    %v408 = vmul.f32 %v321, %v355
    %v409 = vmul.f32 %v324, %v355
    %v410 = vmul.f32 %v327, %v355
    %v411 = vmul.f32 %v330, %v355
    %v412 = vmul.f32 %v333, %v355
    %v413 = vmul.f32 %v336, %v355
    %v414 = vmul.f32 %v339, %v355
    %v415 = vmul.f32 %v342, %v355
    %v416 = vmul.f32 %v345, %v355
    %v417 = vmul.f32 %v348, %v355
    %v418 = vmul.f32 %v351, %v355
    %v419 = vmul.f32 %v354, %v355
    %v420 = vld [vmem:[%s1] sm:$0xff]
    %v421 = vld [vmem:[%s2] sm:$0x1]
    %v422 = vld [vmem:[%s3] sm:$0xff]
    %v423 = vld [vmem:[%s3 + $0x8] sm:$0xff]
    %v424 = vld [vmem:[%s3 + $0x10] sm:$0xff]
    %v425 = vld [vmem:[%s3 + $0x18] sm:$0xff]
    %v426 = vld [vmem:[%s3 + $0x20] sm:$0xff]
    %v427 = vld [vmem:[%s3 + $0x28] sm:$0xff]
    %v428 = vld [vmem:[%s3 + $0x30] sm:$0xff]
    %v429 = vld [vmem:[%s3 + $0x38] sm:$0xff]
    %v430 = vld [vmem:[%s3 + $0x40] sm:$0xff]
    %v431 = vld [vmem:[%s3 + $0x48] sm:$0xff]
    %v432 = vld [vmem:[%s3 + $0x50] sm:$0xff]
    %v433 = vld [vmem:[%s3 + $0x58] sm:$0xff]
    %v434 = vld [vmem:[%s3 + $0x60] sm:$0xff]
    %v435 = vld [vmem:[%s3 + $0x68] sm:$0xff]
    %v436 = vld [vmem:[%s3 + $0x70] sm:$0xff]
    %v437 = vld [vmem:[%s3 + $0x78] sm:$0xff]
    %v438 = vld [vmem:[%s4] sm:$0x1]
    %v440 = vlaneseq
    %v441 = vshrl.u32 %v440, 7
    %v442 = vsub.s32 0, %v441
    %v443 = vrot.slane %v421, %v442
    %v509 = vlaneseq
    %v510 = vand.u32 %v509, 127
    %v511 = vlaneseq
    %v512 = vshrl.u32 %v511, 7
    %v513 = vsub.s32 %v510, %v512
    %v514 = vrot.slane %v356, %v513
    %v515 = vadd.s32 %v510, 4294967288
    %v516 = vlaneseq
    %v517 = vshrl.u32 %v516, 7
    %v518 = vsub.s32 %v515, %v517
    %v519 = vrot.slane %v357, %v518
    %vm520 = vcmask 130112
    %v521 = vsel %vm520, %v519, %v514
    %v522 = vadd.s32 %v510, 4294967280
    %v523 = vlaneseq
    %v524 = vshrl.u32 %v523, 7
    %v525 = vsub.s32 %v522, %v524
    %v526 = vrot.slane %v358, %v525
    %vm527 = vcmask 195712
    %v528 = vsel %vm527, %v526, %v521
    %v529 = vadd.s32 %v510, 4294967272
    %v530 = vlaneseq
    %v531 = vshrl.u32 %v530, 7
    %v532 = vsub.s32 %v529, %v531
    %v533 = vrot.slane %v359, %v532
    %vm534 = vcmask 261312
    %v535 = vsel %vm534, %v533, %v528
    %v536 = vadd.s32 %v510, 4294967264
    %v537 = vlaneseq
    %v538 = vshrl.u32 %v537, 7
    %v539 = vsub.s32 %v536, %v538
    %v540 = vrot.slane %v360, %v539
    %vm541 = vcmask 326912
    %v542 = vsel %vm541, %v540, %v535
    %v543 = vadd.s32 %v510, 4294967256
    %v544 = vlaneseq
    %v545 = vshrl.u32 %v544, 7
    %v546 = vsub.s32 %v543, %v545
    %v547 = vrot.slane %v361, %v546
    %vm548 = vcmask 392512
    %v549 = vsel %vm548, %v547, %v542
    %v550 = vadd.s32 %v510, 4294967248
    %v551 = vlaneseq
    %v552 = vshrl.u32 %v551, 7
    %v553 = vsub.s32 %v550, %v552
    %v554 = vrot.slane %v362, %v553
    %vm555 = vcmask 458112
    %v556 = vsel %vm555, %v554, %v549
    %v557 = vadd.s32 %v510, 4294967240
    %v558 = vlaneseq
    %v559 = vshrl.u32 %v558, 7
    %v560 = vsub.s32 %v557, %v559
    %v561 = vrot.slane %v363, %v560
    %vm562 = vcmask 523712
    %v563 = vsel %vm562, %v561, %v556
    %v564 = vadd.s32 %v510, 4294967232
    %v565 = vlaneseq
    %v566 = vshrl.u32 %v565, 7
    %v567 = vsub.s32 %v564, %v566
    %v568 = vrot.slane %v364, %v567
    %vm569 = vcmask 589312
    %v570 = vsel %vm569, %v568, %v563
    %v571 = vadd.s32 %v510, 4294967224
    %v572 = vlaneseq
    %v573 = vshrl.u32 %v572, 7
    %v574 = vsub.s32 %v571, %v573
    %v575 = vrot.slane %v365, %v574
    %vm576 = vcmask 654912
    %v577 = vsel %vm576, %v575, %v570
    %v578 = vadd.s32 %v510, 4294967216
    %v579 = vlaneseq
    %v580 = vshrl.u32 %v579, 7
    %v581 = vsub.s32 %v578, %v580
    %v582 = vrot.slane %v366, %v581
    %vm583 = vcmask 720512
    %v584 = vsel %vm583, %v582, %v577
    %v585 = vadd.s32 %v510, 4294967208
    %v586 = vlaneseq
    %v587 = vshrl.u32 %v586, 7
    %v588 = vsub.s32 %v585, %v587
    %v589 = vrot.slane %v367, %v588
    %vm590 = vcmask 786112
    %v591 = vsel %vm590, %v589, %v584
    %v592 = vadd.s32 %v510, 4294967200
    %v593 = vlaneseq
    %v594 = vshrl.u32 %v593, 7
    %v595 = vsub.s32 %v592, %v594
    %v596 = vrot.slane %v368, %v595
    %vm597 = vcmask 851712
    %v598 = vsel %vm597, %v596, %v591
    %v599 = vadd.s32 %v510, 4294967192
    %v600 = vlaneseq
    %v601 = vshrl.u32 %v600, 7
    %v602 = vsub.s32 %v599, %v601
    %v603 = vrot.slane %v369, %v602
    %vm604 = vcmask 917312
    %v605 = vsel %vm604, %v603, %v598
    %v606 = vadd.s32 %v510, 4294967184
    %v607 = vlaneseq
    %v608 = vshrl.u32 %v607, 7
    %v609 = vsub.s32 %v606, %v608
    %v610 = vrot.slane %v370, %v609
    %vm611 = vcmask 982912
    %v612 = vsel %vm611, %v610, %v605
    %v613 = vadd.s32 %v510, 4294967176
    %v614 = vlaneseq
    %v615 = vshrl.u32 %v614, 7
    %v616 = vsub.s32 %v613, %v615
    %v617 = vrot.slane %v371, %v616
    %vm618 = vcmask 1048512
    %v619 = vsel %vm618, %v617, %v612
    %v620 = vlaneseq
    %v621 = vshrl.u32 %v620, 7
    %v622 = vsub.s32 %v510, %v621
    %v623 = vrot.slane %v372, %v622
    %v624 = vlaneseq
    %v625 = vshrl.u32 %v624, 7
    %v626 = vsub.s32 %v515, %v625
    %v627 = vrot.slane %v373, %v626
    %v628 = vsel %vm520, %v627, %v623
    %v629 = vlaneseq
    %v630 = vshrl.u32 %v629, 7
    %v631 = vsub.s32 %v522, %v630
    %v632 = vrot.slane %v374, %v631
    %v633 = vsel %vm527, %v632, %v628
    %v634 = vlaneseq
    %v635 = vshrl.u32 %v634, 7
    %v636 = vsub.s32 %v529, %v635
    %v637 = vrot.slane %v375, %v636
    %v638 = vsel %vm534, %v637, %v633
    %v639 = vlaneseq
    %v640 = vshrl.u32 %v639, 7
    %v641 = vsub.s32 %v536, %v640
    %v642 = vrot.slane %v376, %v641
    %v643 = vsel %vm541, %v642, %v638
    %v644 = vlaneseq
    %v645 = vshrl.u32 %v644, 7
    %v646 = vsub.s32 %v543, %v645
    %v647 = vrot.slane %v377, %v646
    %v648 = vsel %vm548, %v647, %v643
    %v649 = vlaneseq
    %v650 = vshrl.u32 %v649, 7
    %v651 = vsub.s32 %v550, %v650
    %v652 = vrot.slane %v378, %v651
    %v653 = vsel %vm555, %v652, %v648
    %v654 = vlaneseq
    %v655 = vshrl.u32 %v654, 7
    %v656 = vsub.s32 %v557, %v655
    %v657 = vrot.slane %v379, %v656
    %v658 = vsel %vm562, %v657, %v653
    %v659 = vlaneseq
    %v660 = vshrl.u32 %v659, 7
    %v661 = vsub.s32 %v564, %v660
    %v662 = vrot.slane %v380, %v661
    %v663 = vsel %vm569, %v662, %v658
    %v664 = vlaneseq
    %v665 = vshrl.u32 %v664, 7
    %v666 = vsub.s32 %v571, %v665
    %v667 = vrot.slane %v381, %v666
    %v668 = vsel %vm576, %v667, %v663
    %v669 = vlaneseq
    %v670 = vshrl.u32 %v669, 7
    %v671 = vsub.s32 %v578, %v670
    %v672 = vrot.slane %v382, %v671
    %v673 = vsel %vm583, %v672, %v668
    %v674 = vlaneseq
    %v675 = vshrl.u32 %v674, 7
    %v676 = vsub.s32 %v585, %v675
    %v677 = vrot.slane %v383, %v676
    %v678 = vsel %vm590, %v677, %v673
    %v679 = vlaneseq
    %v680 = vshrl.u32 %v679, 7
    %v681 = vsub.s32 %v592, %v680
    %v682 = vrot.slane %v384, %v681
    %v683 = vsel %vm597, %v682, %v678
    %v684 = vlaneseq
    %v685 = vshrl.u32 %v684, 7
    %v686 = vsub.s32 %v599, %v685
    %v687 = vrot.slane %v385, %v686
    %v688 = vsel %vm604, %v687, %v683
    %v689 = vlaneseq
    %v690 = vshrl.u32 %v689, 7
    %v691 = vsub.s32 %v606, %v690
    %v692 = vrot.slane %v386, %v691
    %v693 = vsel %vm611, %v692, %v688
    %v694 = vlaneseq
    %v695 = vshrl.u32 %v694, 7
    %v696 = vsub.s32 %v613, %v695
    %v697 = vrot.slane %v387, %v696
    %v698 = vsel %vm618, %v697, %v693
    %v699 = vlaneseq
    %v700 = vshrl.u32 %v699, 7
    %v701 = vsub.s32 %v510, %v700
    %v702 = vrot.slane %v388, %v701
    %v703 = vlaneseq
    %v704 = vshrl.u32 %v703, 7
    %v705 = vsub.s32 %v515, %v704
    %v706 = vrot.slane %v389, %v705
    %v707 = vsel %vm520, %v706, %v702
    %v708 = vlaneseq
    %v709 = vshrl.u32 %v708, 7
    %v710 = vsub.s32 %v522, %v709
    %v711 = vrot.slane %v390, %v710
    %v712 = vsel %vm527, %v711, %v707
    %v713 = vlaneseq
    %v714 = vshrl.u32 %v713, 7
    %v715 = vsub.s32 %v529, %v714
    %v716 = vrot.slane %v391, %v715
    %v717 = vsel %vm534, %v716, %v712
    %v718 = vlaneseq
    %v719 = vshrl.u32 %v718, 7
    %v720 = vsub.s32 %v536, %v719
    %v721 = vrot.slane %v392, %v720
    %v722 = vsel %vm541, %v721, %v717
    %v723 = vlaneseq
    %v724 = vshrl.u32 %v723, 7
    %v725 = vsub.s32 %v543, %v724
    %v726 = vrot.slane %v393, %v725
    %v727 = vsel %vm548, %v726, %v722
    %v728 = vlaneseq
    %v729 = vshrl.u32 %v728, 7
    %v730 = vsub.s32 %v550, %v729
    %v731 = vrot.slane %v394, %v730
    %v732 = vsel %vm555, %v731, %v727
    %v733 = vlaneseq
    %v734 = vshrl.u32 %v733, 7
    %v735 = vsub.s32 %v557, %v734
    %v736 = vrot.slane %v395, %v735
    %v737 = vsel %vm562, %v736, %v732
    %v738 = vlaneseq
    %v739 = vshrl.u32 %v738, 7
    %v740 = vsub.s32 %v564, %v739
    %v741 = vrot.slane %v396, %v740
    %v742 = vsel %vm569, %v741, %v737
    %v743 = vlaneseq
    %v744 = vshrl.u32 %v743, 7
    %v745 = vsub.s32 %v571, %v744
    %v746 = vrot.slane %v397, %v745
    %v747 = vsel %vm576, %v746, %v742
    %v748 = vlaneseq
    %v749 = vshrl.u32 %v748, 7
    %v750 = vsub.s32 %v578, %v749
    %v751 = vrot.slane %v398, %v750
    %v752 = vsel %vm583, %v751, %v747
    %v753 = vlaneseq
    %v754 = vshrl.u32 %v753, 7
    %v755 = vsub.s32 %v585, %v754
    %v756 = vrot.slane %v399, %v755
    %v757 = vsel %vm590, %v756, %v752
    %v758 = vlaneseq
    %v759 = vshrl.u32 %v758, 7
    %v760 = vsub.s32 %v592, %v759
    %v761 = vrot.slane %v400, %v760
    %v762 = vsel %vm597, %v761, %v757
    %v763 = vlaneseq
    %v764 = vshrl.u32 %v763, 7
    %v765 = vsub.s32 %v599, %v764
    %v766 = vrot.slane %v401, %v765
    %v767 = vsel %vm604, %v766, %v762
    %v768 = vlaneseq
    %v769 = vshrl.u32 %v768, 7
    %v770 = vsub.s32 %v606, %v769
    %v771 = vrot.slane %v402, %v770
    %v772 = vsel %vm611, %v771, %v767
    %v773 = vlaneseq
    %v774 = vshrl.u32 %v773, 7
    %v775 = vsub.s32 %v613, %v774
    %v776 = vrot.slane %v403, %v775
    %v777 = vsel %vm618, %v776, %v772
    %v778 = vlaneseq
    %v779 = vshrl.u32 %v778, 7
    %v780 = vsub.s32 %v510, %v779
    %v781 = vrot.slane %v404, %v780
    %v782 = vlaneseq
    %v783 = vshrl.u32 %v782, 7
    %v784 = vsub.s32 %v515, %v783
    %v785 = vrot.slane %v405, %v784
    %v786 = vsel %vm520, %v785, %v781
    %v787 = vlaneseq
    %v788 = vshrl.u32 %v787, 7
    %v789 = vsub.s32 %v522, %v788
    %v790 = vrot.slane %v406, %v789
    %v791 = vsel %vm527, %v790, %v786
    %v792 = vlaneseq
    %v793 = vshrl.u32 %v792, 7
    %v794 = vsub.s32 %v529, %v793
    %v795 = vrot.slane %v407, %v794
    %v796 = vsel %vm534, %v795, %v791
    %v797 = vlaneseq
    %v798 = vshrl.u32 %v797, 7
    %v799 = vsub.s32 %v536, %v798
    %v800 = vrot.slane %v408, %v799
    %v801 = vsel %vm541, %v800, %v796
    %v802 = vlaneseq
    %v803 = vshrl.u32 %v802, 7
    %v804 = vsub.s32 %v543, %v803
    %v805 = vrot.slane %v409, %v804
    %v806 = vsel %vm548, %v805, %v801
    %v807 = vlaneseq
    %v808 = vshrl.u32 %v807, 7
    %v809 = vsub.s32 %v550, %v808
    %v810 = vrot.slane %v410, %v809
    %v811 = vsel %vm555, %v810, %v806
    %v812 = vlaneseq
    %v813 = vshrl.u32 %v812, 7
    %v814 = vsub.s32 %v557, %v813
    %v815 = vrot.slane %v411, %v814
    %v816 = vsel %vm562, %v815, %v811
    %v817 = vlaneseq
    %v818 = vshrl.u32 %v817, 7
    %v819 = vsub.s32 %v564, %v818
    %v820 = vrot.slane %v412, %v819
    %v821 = vsel %vm569, %v820, %v816
    %v822 = vlaneseq
    %v823 = vshrl.u32 %v822, 7
    %v824 = vsub.s32 %v571, %v823
    %v825 = vrot.slane %v413, %v824
    %v826 = vsel %vm576, %v825, %v821
    %v827 = vlaneseq
    %v828 = vshrl.u32 %v827, 7
    %v829 = vsub.s32 %v578, %v828
    %v830 = vrot.slane %v414, %v829
    %v831 = vsel %vm583, %v830, %v826
    %v832 = vlaneseq
    %v833 = vshrl.u32 %v832, 7
    %v834 = vsub.s32 %v585, %v833
    %v835 = vrot.slane %v415, %v834
    %v836 = vsel %vm590, %v835, %v831
    %v837 = vlaneseq
    %v838 = vshrl.u32 %v837, 7
    %v839 = vsub.s32 %v592, %v838
    %v840 = vrot.slane %v416, %v839
    %v841 = vsel %vm597, %v840, %v836
    %v842 = vlaneseq
    %v843 = vshrl.u32 %v842, 7
    %v844 = vsub.s32 %v599, %v843
    %v845 = vrot.slane %v417, %v844
    %v846 = vsel %vm604, %v845, %v841
    %v847 = vlaneseq
    %v848 = vshrl.u32 %v847, 7
    %v849 = vsub.s32 %v606, %v848
    %v850 = vrot.slane %v418, %v849
    %v851 = vsel %vm611, %v850, %v846
    %v852 = vlaneseq
    %v853 = vshrl.u32 %v852, 7
    %v854 = vsub.s32 %v613, %v853
    %v855 = vrot.slane %v419, %v854
    %v856 = vsel %vm618, %v855, %v851
    %vm857 = vcmask 1041409
    %v858 = vsel %vm857, %v698, %v619
    %vm859 = vcmask 1042434
    %v860 = vsel %vm859, %v777, %v858
    %vm861 = vcmask 1043459
    %v862 = vsel %vm861, %v856, %v860
    %864 = vmatprep.subr.mxu0 0.0
    %865 = vmatpush1.xpose.msra.mxu0 0.0
    %866 = vmatprep.subr.mxu0 0.0
    %867 = vmatpush1.xpose.msra.mxu0 0.0
    %868 = vmatprep.subr.mxu0 0.0
    %869 = vmatpush1.xpose.msra.mxu0 0.0
    %870 = vmatprep.subr.mxu0 0.0
    %871 = vmatpush1.xpose.msra.mxu0 0.0
    %872 = vmatprep.subr.mxu0 0.0
    %873 = vmatpush1.xpose.msra.mxu0 0.0
    %874 = vmatprep.subr.mxu0 0.0
    %875 = vmatpush1.xpose.msra.mxu0 0.0
    %876 = vmatprep.subr.mxu0 0.0
    %877 = vmatpush1.xpose.msra.mxu0 0.0
    %878 = vmatprep.subr.mxu0 0.0
    %879 = vmatpush1.xpose.msra.mxu0 0.0
    %880 = vmatprep.subr.mxu0 0.0
    %881 = vmatpush1.xpose.msra.mxu0 0.0
    %882 = vmatprep.subr.mxu0 0.0
    %883 = vmatpush1.xpose.msra.mxu0 0.0
    %884 = vmatprep.subr.mxu0 0.0
    %885 = vmatpush1.xpose.msra.mxu0 0.0
    %886 = vmatprep.subr.mxu0 0.0
    %887 = vmatpush1.xpose.msra.mxu0 0.0
    %888 = vmatprep.subr.mxu0 0.0
    %889 = vmatpush1.xpose.msra.mxu0 0.0
    %890 = vmatprep.subr.mxu0 0.0
    %891 = vmatpush1.xpose.msra.mxu0 0.0
    %892 = vmatprep.subr.mxu0 0.0
    %893 = vmatpush1.xpose.msra.mxu0 0.0
    %894 = vmatprep.subr.mxu0 0.0
    %895 = vmatpush1.xpose.msra.mxu0 %v420
    %896 = vmatprep.subr.mxu0 0.0
    %897 = vmatpush2.xpose.msra.mxu0 0.0
    %898 = vmatprep.subr.mxu0 0.0
    %899 = vmatpush2.xpose.msra.mxu0 0.0
    %900 = vmatprep.subr.mxu0 0.0
    %901 = vmatpush2.xpose.msra.mxu0 0.0
    %902 = vmatprep.subr.mxu0 0.0
    %903 = vmatpush2.xpose.msra.mxu0 0.0
    %904 = vmatprep.subr.mxu0 0.0
    %905 = vmatpush2.xpose.msra.mxu0 0.0
    %906 = vmatprep.subr.mxu0 0.0
    %907 = vmatpush2.xpose.msra.mxu0 0.0
    %908 = vmatprep.subr.mxu0 0.0
    %909 = vmatpush2.xpose.msra.mxu0 0.0
    %910 = vmatprep.subr.mxu0 0.0
    %911 = vmatpush2.xpose.msra.mxu0 0.0
    %912 = vmatprep.subr.mxu0 0.0
    %913 = vmatpush2.xpose.msra.mxu0 0.0
    %914 = vmatprep.subr.mxu0 0.0
    %915 = vmatpush2.xpose.msra.mxu0 0.0
    %916 = vmatprep.subr.mxu0 0.0
    %917 = vmatpush2.xpose.msra.mxu0 0.0
    %918 = vmatprep.subr.mxu0 0.0
    %919 = vmatpush2.xpose.msra.mxu0 0.0
    %920 = vmatprep.subr.mxu0 0.0
    %921 = vmatpush2.xpose.msra.mxu0 0.0
    %922 = vmatprep.subr.mxu0 0.0
    %923 = vmatpush2.xpose.msra.mxu0 0.0
    %924 = vmatprep.subr.mxu0 0.0
    %925 = vmatpush2.xpose.msra.mxu0 0.0
    %926 = vmatprep.subr.mxu0 0.0
    %927 = vmatpush2.xpose.msra.mxu0 0.0
    %928 = vmatprep.mubr.f32.mxu0 0.0
    %929 = vmatmul.mubr.f32.gmra.mxu0 %v862
    %v930 = vpop.f32.mrf.mxu0
    %v931 = vadd.f32 %v443, %v930
    %v932 = vpop.f32.mrf.mxu0
    %933 = vdwg.mxu0
    %v934 = vxor.u32 %v931, 2147483648
    %v935 = vmul.f32 %v934, 1.442695
    %v936 = vpow.pop %v935
    %v937 = vadd.f32 %v936, 1.0
    %v938 = vrcp.pop %v937
    %v939 = vmul.f32 1.0, %v938
    %v940 = vmul.f32 %v931, %v939
    %v942 = vlaneseq
    %v943 = vshrl.u32 %v942, 7
    %v944 = vsub.s32 0, %v943
    %v945 = vrot.slane %v438, %v944
    %vm947 = vcmask 64512
    %v949 = vsel %vm947, %v940, 0
    %v952 = vsel %vm947, %v422, 0
    %v955 = vsel %vm947, %v423, 0
    %v958 = vsel %vm947, %v424, 0
    %v961 = vsel %vm947, %v425, 0
    %v964 = vsel %vm947, %v426, 0
    %v967 = vsel %vm947, %v427, 0
    %v970 = vsel %vm947, %v428, 0
    %v973 = vsel %vm947, %v429, 0
    %v976 = vsel %vm947, %v430, 0
    %v979 = vsel %vm947, %v431, 0
    %v982 = vsel %vm947, %v432, 0
    %v985 = vsel %vm947, %v433, 0
    %v988 = vsel %vm947, %v434, 0
    %v991 = vsel %vm947, %v435, 0
    %v994 = vsel %vm947, %v436, 0
    %v997 = vsel %vm947, %v437, 0
    %999 = vmatprep.subr.mxu0 0.0
    %1000 = vmatpush1.xpose.msra.mxu0 %v997
    %1001 = vmatprep.subr.mxu0 0.0
    %1002 = vmatpush1.xpose.msra.mxu0 %v994
    %1003 = vmatprep.subr.mxu0 0.0
    %1004 = vmatpush1.xpose.msra.mxu0 %v991
    %1005 = vmatprep.subr.mxu0 0.0
    %1006 = vmatpush1.xpose.msra.mxu0 %v988
    %1007 = vmatprep.subr.mxu0 0.0
    %1008 = vmatpush1.xpose.msra.mxu0 %v985
    %1009 = vmatprep.subr.mxu0 0.0
    %1010 = vmatpush1.xpose.msra.mxu0 %v982
    %1011 = vmatprep.subr.mxu0 0.0
    %1012 = vmatpush1.xpose.msra.mxu0 %v979
    %1013 = vmatprep.subr.mxu0 0.0
    %1014 = vmatpush1.xpose.msra.mxu0 %v976
    %1015 = vmatprep.subr.mxu0 0.0
    %1016 = vmatpush1.xpose.msra.mxu0 %v973
    %1017 = vmatprep.subr.mxu0 0.0
    %1018 = vmatpush1.xpose.msra.mxu0 %v970
    %1019 = vmatprep.subr.mxu0 0.0
    %1020 = vmatpush1.xpose.msra.mxu0 %v967
    %1021 = vmatprep.subr.mxu0 0.0
    %1022 = vmatpush1.xpose.msra.mxu0 %v964
    %1023 = vmatprep.subr.mxu0 0.0
    %1024 = vmatpush1.xpose.msra.mxu0 %v961
    %1025 = vmatprep.subr.mxu0 0.0
    %1026 = vmatpush1.xpose.msra.mxu0 %v958
    %1027 = vmatprep.subr.mxu0 0.0
    %1028 = vmatpush1.xpose.msra.mxu0 %v955
    %1029 = vmatprep.subr.mxu0 0.0
    %1030 = vmatpush1.xpose.msra.mxu0 %v952
    %1031 = vmatprep.subr.mxu0 0.0
    %1032 = vmatpush2.xpose.msra.mxu0 0.0
    %1033 = vmatprep.subr.mxu0 0.0
    %1034 = vmatpush2.xpose.msra.mxu0 0.0
    %1035 = vmatprep.subr.mxu0 0.0
    %1036 = vmatpush2.xpose.msra.mxu0 0.0
    %1037 = vmatprep.subr.mxu0 0.0
    %1038 = vmatpush2.xpose.msra.mxu0 0.0
    %1039 = vmatprep.subr.mxu0 0.0
    %1040 = vmatpush2.xpose.msra.mxu0 0.0
    %1041 = vmatprep.subr.mxu0 0.0
    %1042 = vmatpush2.xpose.msra.mxu0 0.0
    %1043 = vmatprep.subr.mxu0 0.0
    %1044 = vmatpush2.xpose.msra.mxu0 0.0
    %1045 = vmatprep.subr.mxu0 0.0
    %1046 = vmatpush2.xpose.msra.mxu0 0.0
    %1047 = vmatprep.subr.mxu0 0.0
    %1048 = vmatpush2.xpose.msra.mxu0 0.0
    %1049 = vmatprep.subr.mxu0 0.0
    %1050 = vmatpush2.xpose.msra.mxu0 0.0
    %1051 = vmatprep.subr.mxu0 0.0
    %1052 = vmatpush2.xpose.msra.mxu0 0.0
    %1053 = vmatprep.subr.mxu0 0.0
    %1054 = vmatpush2.xpose.msra.mxu0 0.0
    %1055 = vmatprep.subr.mxu0 0.0
    %1056 = vmatpush2.xpose.msra.mxu0 0.0
    %1057 = vmatprep.subr.mxu0 0.0
    %1058 = vmatpush2.xpose.msra.mxu0 0.0
    %1059 = vmatprep.subr.mxu0 0.0
    %1060 = vmatpush2.xpose.msra.mxu0 0.0
    %1061 = vmatprep.subr.mxu0 0.0
    %1062 = vmatpush2.xpose.msra.mxu0 0.0
    %1063 = vmatprep.mubr.f32.mxu0 0.0
    %1064 = vmatmul.mubr.f32.gmra.mxu0 %v949
    %v1065 = vpop.f32.mrf.mxu0
    %v1066 = vadd.f32 %v945, %v1065
    %v1067 = vpop.f32.mrf.mxu0
    %1068 = vdwg.mxu0
    %v1069 = vxor.u32 %v1066, 2147483648
    %v1070 = vmul.f32 %v1069, 1.442695
    %v1071 = vpow.pop %v1070
    %v1072 = vadd.f32 %v1071, 1.0
    %v1073 = vrcp.pop %v1072
    %v1074 = vmul.f32 1.0, %v1073
    %v1075 = vlaneseq
    %v1076 = vshrl.u32 %v1075, 7
    %v1077 = vsub.s32 0, %v1076
    %v1078 = vrot.slane %v1074, %v1077
    %1080 = vbcast.lane.b32.xlu0 %v1078, 256
    %v1081 = vpop.permute.xlu0 %1080
    %s1083 = sor.u32 256, 8
    %1084 = vbcast.lane.b32.xlu0 %v1078, %s1083
    %v1085 = vpop.permute.xlu0 %1084
    %s1087 = sor.u32 256, 16
    %1088 = vbcast.lane.b32.xlu0 %v1078, %s1087
    %v1089 = vpop.permute.xlu0 %1088
    %s1091 = sor.u32 256, 24
    %1092 = vbcast.lane.b32.xlu0 %v1078, %s1091
    %v1093 = vpop.permute.xlu0 %1092
    %s1095 = sor.u32 256, 32
    %1096 = vbcast.lane.b32.xlu0 %v1078, %s1095
    %v1097 = vpop.permute.xlu0 %1096
    %s1099 = sor.u32 256, 40
    %1100 = vbcast.lane.b32.xlu0 %v1078, %s1099
    %v1101 = vpop.permute.xlu0 %1100
    %s1103 = sor.u32 256, 48
    %1104 = vbcast.lane.b32.xlu0 %v1078, %s1103
    %v1105 = vpop.permute.xlu0 %1104
    %s1107 = sor.u32 256, 56
    %1108 = vbcast.lane.b32.xlu0 %v1078, %s1107
    %v1109 = vpop.permute.xlu0 %1108
    %s1111 = sor.u32 256, 64
    %1112 = vbcast.lane.b32.xlu0 %v1078, %s1111
    %v1113 = vpop.permute.xlu0 %1112
    %s1115 = sor.u32 256, 72
    %1116 = vbcast.lane.b32.xlu0 %v1078, %s1115
    %v1117 = vpop.permute.xlu0 %1116
    %s1119 = sor.u32 256, 80
    %1120 = vbcast.lane.b32.xlu0 %v1078, %s1119
    %v1121 = vpop.permute.xlu0 %1120
    %s1123 = sor.u32 256, 88
    %1124 = vbcast.lane.b32.xlu0 %v1078, %s1123
    %v1125 = vpop.permute.xlu0 %1124
    %s1127 = sor.u32 256, 96
    %1128 = vbcast.lane.b32.xlu0 %v1078, %s1127
    %v1129 = vpop.permute.xlu0 %1128
    %s1131 = sor.u32 256, 104
    %1132 = vbcast.lane.b32.xlu0 %v1078, %s1131
    %v1133 = vpop.permute.xlu0 %1132
    %s1135 = sor.u32 256, 112
    %1136 = vbcast.lane.b32.xlu0 %v1078, %s1135
    %v1137 = vpop.permute.xlu0 %1136
    %s1139 = sor.u32 256, 120
    %1140 = vbcast.lane.b32.xlu0 %v1078, %s1139
    %v1141 = vpop.permute.xlu0 %1140
    %v1142 = vlaneseq
    %v1143 = vshrl.u32 %v1142, 7
    %v1144 = vsub.s32 1, %v1143
    %v1145 = vrot.slane %v1074, %v1144
    %1147 = vbcast.lane.b32.xlu0 %v1145, 256
    %v1148 = vpop.permute.xlu0 %1147
    %s1150 = sor.u32 256, 8
    %1151 = vbcast.lane.b32.xlu0 %v1145, %s1150
    %v1152 = vpop.permute.xlu0 %1151
    %s1154 = sor.u32 256, 16
    %1155 = vbcast.lane.b32.xlu0 %v1145, %s1154
    %v1156 = vpop.permute.xlu0 %1155
    %s1158 = sor.u32 256, 24
    %1159 = vbcast.lane.b32.xlu0 %v1145, %s1158
    %v1160 = vpop.permute.xlu0 %1159
    %s1162 = sor.u32 256, 32
    %1163 = vbcast.lane.b32.xlu0 %v1145, %s1162
    %v1164 = vpop.permute.xlu0 %1163
    %s1166 = sor.u32 256, 40
    %1167 = vbcast.lane.b32.xlu0 %v1145, %s1166
    %v1168 = vpop.permute.xlu0 %1167
    %s1170 = sor.u32 256, 48
    %1171 = vbcast.lane.b32.xlu0 %v1145, %s1170
    %v1172 = vpop.permute.xlu0 %1171
    %s1174 = sor.u32 256, 56
    %1175 = vbcast.lane.b32.xlu0 %v1145, %s1174
    %v1176 = vpop.permute.xlu0 %1175
    %s1178 = sor.u32 256, 64
    %1179 = vbcast.lane.b32.xlu0 %v1145, %s1178
    %v1180 = vpop.permute.xlu0 %1179
    %s1182 = sor.u32 256, 72
    %1183 = vbcast.lane.b32.xlu0 %v1145, %s1182
    %v1184 = vpop.permute.xlu0 %1183
    %s1186 = sor.u32 256, 80
    %1187 = vbcast.lane.b32.xlu0 %v1145, %s1186
    %v1188 = vpop.permute.xlu0 %1187
    %s1190 = sor.u32 256, 88
    %1191 = vbcast.lane.b32.xlu0 %v1145, %s1190
    %v1192 = vpop.permute.xlu0 %1191
    %s1194 = sor.u32 256, 96
    %1195 = vbcast.lane.b32.xlu0 %v1145, %s1194
    %v1196 = vpop.permute.xlu0 %1195
    %s1198 = sor.u32 256, 104
    %1199 = vbcast.lane.b32.xlu0 %v1145, %s1198
    %v1200 = vpop.permute.xlu0 %1199
    %s1202 = sor.u32 256, 112
    %1203 = vbcast.lane.b32.xlu0 %v1145, %s1202
    %v1204 = vpop.permute.xlu0 %1203
    %s1206 = sor.u32 256, 120
    %1207 = vbcast.lane.b32.xlu0 %v1145, %s1206
    %v1208 = vpop.permute.xlu0 %1207
    %v1209 = vlaneseq
    %v1210 = vshrl.u32 %v1209, 7
    %v1211 = vsub.s32 2, %v1210
    %v1212 = vrot.slane %v1074, %v1211
    %1214 = vbcast.lane.b32.xlu0 %v1212, 256
    %v1215 = vpop.permute.xlu0 %1214
    %s1217 = sor.u32 256, 8
    %1218 = vbcast.lane.b32.xlu0 %v1212, %s1217
    %v1219 = vpop.permute.xlu0 %1218
    %s1221 = sor.u32 256, 16
    %1222 = vbcast.lane.b32.xlu0 %v1212, %s1221
    %v1223 = vpop.permute.xlu0 %1222
    %s1225 = sor.u32 256, 24
    %1226 = vbcast.lane.b32.xlu0 %v1212, %s1225
    %v1227 = vpop.permute.xlu0 %1226
    %s1229 = sor.u32 256, 32
    %1230 = vbcast.lane.b32.xlu0 %v1212, %s1229
    %v1231 = vpop.permute.xlu0 %1230
    %s1233 = sor.u32 256, 40
    %1234 = vbcast.lane.b32.xlu0 %v1212, %s1233
    %v1235 = vpop.permute.xlu0 %1234
    %s1237 = sor.u32 256, 48
    %1238 = vbcast.lane.b32.xlu0 %v1212, %s1237
    %v1239 = vpop.permute.xlu0 %1238
    %s1241 = sor.u32 256, 56
    %1242 = vbcast.lane.b32.xlu0 %v1212, %s1241
    %v1243 = vpop.permute.xlu0 %1242
    %s1245 = sor.u32 256, 64
    %1246 = vbcast.lane.b32.xlu0 %v1212, %s1245
    %v1247 = vpop.permute.xlu0 %1246
    %s1249 = sor.u32 256, 72
    %1250 = vbcast.lane.b32.xlu0 %v1212, %s1249
    %v1251 = vpop.permute.xlu0 %1250
    %s1253 = sor.u32 256, 80
    %1254 = vbcast.lane.b32.xlu0 %v1212, %s1253
    %v1255 = vpop.permute.xlu0 %1254
    %s1257 = sor.u32 256, 88
    %1258 = vbcast.lane.b32.xlu0 %v1212, %s1257
    %v1259 = vpop.permute.xlu0 %1258
    %s1261 = sor.u32 256, 96
    %1262 = vbcast.lane.b32.xlu0 %v1212, %s1261
    %v1263 = vpop.permute.xlu0 %1262
    %s1265 = sor.u32 256, 104
    %1266 = vbcast.lane.b32.xlu0 %v1212, %s1265
    %v1267 = vpop.permute.xlu0 %1266
    %s1269 = sor.u32 256, 112
    %1270 = vbcast.lane.b32.xlu0 %v1212, %s1269
    %v1271 = vpop.permute.xlu0 %1270
    %s1273 = sor.u32 256, 120
    %1274 = vbcast.lane.b32.xlu0 %v1212, %s1273
    %v1275 = vpop.permute.xlu0 %1274
    %v1276 = vlaneseq
    %v1277 = vshrl.u32 %v1276, 7
    %v1278 = vsub.s32 3, %v1277
    %v1279 = vrot.slane %v1074, %v1278
    %1281 = vbcast.lane.b32.xlu0 %v1279, 256
    %v1282 = vpop.permute.xlu0 %1281
    %s1284 = sor.u32 256, 8
    %1285 = vbcast.lane.b32.xlu0 %v1279, %s1284
    %v1286 = vpop.permute.xlu0 %1285
    %s1288 = sor.u32 256, 16
    %1289 = vbcast.lane.b32.xlu0 %v1279, %s1288
    %v1290 = vpop.permute.xlu0 %1289
    %s1292 = sor.u32 256, 24
    %1293 = vbcast.lane.b32.xlu0 %v1279, %s1292
    %v1294 = vpop.permute.xlu0 %1293
    %s1296 = sor.u32 256, 32
    %1297 = vbcast.lane.b32.xlu0 %v1279, %s1296
    %v1298 = vpop.permute.xlu0 %1297
    %s1300 = sor.u32 256, 40
    %1301 = vbcast.lane.b32.xlu0 %v1279, %s1300
    %v1302 = vpop.permute.xlu0 %1301
    %s1304 = sor.u32 256, 48
    %1305 = vbcast.lane.b32.xlu0 %v1279, %s1304
    %v1306 = vpop.permute.xlu0 %1305
    %s1308 = sor.u32 256, 56
    %1309 = vbcast.lane.b32.xlu0 %v1279, %s1308
    %v1310 = vpop.permute.xlu0 %1309
    %s1312 = sor.u32 256, 64
    %1313 = vbcast.lane.b32.xlu0 %v1279, %s1312
    %v1314 = vpop.permute.xlu0 %1313
    %s1316 = sor.u32 256, 72
    %1317 = vbcast.lane.b32.xlu0 %v1279, %s1316
    %v1318 = vpop.permute.xlu0 %1317
    %s1320 = sor.u32 256, 80
    %1321 = vbcast.lane.b32.xlu0 %v1279, %s1320
    %v1322 = vpop.permute.xlu0 %1321
    %s1324 = sor.u32 256, 88
    %1325 = vbcast.lane.b32.xlu0 %v1279, %s1324
    %v1326 = vpop.permute.xlu0 %1325
    %s1328 = sor.u32 256, 96
    %1329 = vbcast.lane.b32.xlu0 %v1279, %s1328
    %v1330 = vpop.permute.xlu0 %1329
    %s1332 = sor.u32 256, 104
    %1333 = vbcast.lane.b32.xlu0 %v1279, %s1332
    %v1334 = vpop.permute.xlu0 %1333
    %s1336 = sor.u32 256, 112
    %1337 = vbcast.lane.b32.xlu0 %v1279, %s1336
    %v1338 = vpop.permute.xlu0 %1337
    %s1340 = sor.u32 256, 120
    %1341 = vbcast.lane.b32.xlu0 %v1279, %s1340
    %v1342 = vpop.permute.xlu0 %1341
    %v1343 = vmul.f32 %v35, %v1081
    %v1344 = vmul.f32 %v36, %v1081
    %v1345 = vmul.f32 %v37, %v1085
    %v1346 = vmul.f32 %v38, %v1085
    %v1347 = vmul.f32 %v39, %v1089
    %v1348 = vmul.f32 %v40, %v1089
    %v1349 = vmul.f32 %v41, %v1093
    %v1350 = vmul.f32 %v42, %v1093
    %v1351 = vmul.f32 %v43, %v1097
    %v1352 = vmul.f32 %v44, %v1097
    %v1353 = vmul.f32 %v45, %v1101
    %v1354 = vmul.f32 %v46, %v1101
    %v1355 = vmul.f32 %v47, %v1105
    %v1356 = vmul.f32 %v48, %v1105
    %v1357 = vmul.f32 %v49, %v1109
    %v1358 = vmul.f32 %v50, %v1109
    %v1359 = vmul.f32 %v51, %v1113
    %v1360 = vmul.f32 %v52, %v1113
    %v1361 = vmul.f32 %v53, %v1117
    %v1362 = vmul.f32 %v54, %v1117
    %v1363 = vmul.f32 %v55, %v1121
    %v1364 = vmul.f32 %v56, %v1121
    %v1365 = vmul.f32 %v57, %v1125
    %v1366 = vmul.f32 %v58, %v1125
    %v1367 = vmul.f32 %v59, %v1129
    %v1368 = vmul.f32 %v60, %v1129
    %v1369 = vmul.f32 %v61, %v1133
    %v1370 = vmul.f32 %v62, %v1133
    %v1371 = vmul.f32 %v63, %v1137
    %v1372 = vmul.f32 %v64, %v1137
    %v1373 = vmul.f32 %v65, %v1141
    %v1374 = vmul.f32 %v66, %v1141
    %v1375 = vmul.f32 %v67, %v1148
    %v1376 = vmul.f32 %v68, %v1148
    %v1377 = vmul.f32 %v69, %v1152
    %v1378 = vmul.f32 %v70, %v1152
    %v1379 = vmul.f32 %v71, %v1156
    %v1380 = vmul.f32 %v72, %v1156
    %v1381 = vmul.f32 %v73, %v1160
    %v1382 = vmul.f32 %v74, %v1160
    %v1383 = vmul.f32 %v75, %v1164
    %v1384 = vmul.f32 %v76, %v1164
    %v1385 = vmul.f32 %v77, %v1168
    %v1386 = vmul.f32 %v78, %v1168
    %v1387 = vmul.f32 %v79, %v1172
    %v1388 = vmul.f32 %v80, %v1172
    %v1389 = vmul.f32 %v81, %v1176
    %v1390 = vmul.f32 %v82, %v1176
    %v1391 = vmul.f32 %v83, %v1180
    %v1392 = vmul.f32 %v84, %v1180
    %v1393 = vmul.f32 %v85, %v1184
    %v1394 = vmul.f32 %v86, %v1184
    %v1395 = vmul.f32 %v87, %v1188
    %v1396 = vmul.f32 %v88, %v1188
    %v1397 = vmul.f32 %v89, %v1192
    %v1398 = vmul.f32 %v90, %v1192
    %v1399 = vmul.f32 %v91, %v1196
    %v1400 = vmul.f32 %v92, %v1196
    %v1401 = vmul.f32 %v93, %v1200
    %v1402 = vmul.f32 %v94, %v1200
    %v1403 = vmul.f32 %v95, %v1204
    %v1404 = vmul.f32 %v96, %v1204
    %v1405 = vmul.f32 %v97, %v1208
    %v1406 = vmul.f32 %v98, %v1208
    %v1407 = vmul.f32 %v99, %v1215
    %v1408 = vmul.f32 %v100, %v1215
    %v1409 = vmul.f32 %v101, %v1219
    %v1410 = vmul.f32 %v102, %v1219
    %v1411 = vmul.f32 %v103, %v1223
    %v1412 = vmul.f32 %v104, %v1223
    %v1413 = vmul.f32 %v105, %v1227
    %v1414 = vmul.f32 %v106, %v1227
    %v1415 = vmul.f32 %v107, %v1231
    %v1416 = vmul.f32 %v108, %v1231
    %v1417 = vmul.f32 %v109, %v1235
    %v1418 = vmul.f32 %v110, %v1235
    %v1419 = vmul.f32 %v111, %v1239
    %v1420 = vmul.f32 %v112, %v1239
    %v1421 = vmul.f32 %v113, %v1243
    %v1422 = vmul.f32 %v114, %v1243
    %v1423 = vmul.f32 %v115, %v1247
    %v1424 = vmul.f32 %v116, %v1247
    %v1425 = vmul.f32 %v117, %v1251
    %v1426 = vmul.f32 %v118, %v1251
    %v1427 = vmul.f32 %v119, %v1255
    %v1428 = vmul.f32 %v120, %v1255
    %v1429 = vmul.f32 %v121, %v1259
    %v1430 = vmul.f32 %v122, %v1259
    %v1431 = vmul.f32 %v123, %v1263
    %v1432 = vmul.f32 %v124, %v1263
    %v1433 = vmul.f32 %v125, %v1267
    %v1434 = vmul.f32 %v126, %v1267
    %v1435 = vmul.f32 %v127, %v1271
    %v1436 = vmul.f32 %v128, %v1271
    %v1437 = vmul.f32 %v129, %v1275
    %v1438 = vmul.f32 %v130, %v1275
    %v1439 = vmul.f32 %v131, %v1282
    %v1440 = vmul.f32 %v132, %v1282
    %v1441 = vmul.f32 %v133, %v1286
    %v1442 = vmul.f32 %v134, %v1286
    %v1443 = vmul.f32 %v135, %v1290
    %v1444 = vmul.f32 %v136, %v1290
    %v1445 = vmul.f32 %v137, %v1294
    %v1446 = vmul.f32 %v138, %v1294
    %v1447 = vmul.f32 %v139, %v1298
    %v1448 = vmul.f32 %v140, %v1298
    %v1449 = vmul.f32 %v141, %v1302
    %v1450 = vmul.f32 %v142, %v1302
    %v1451 = vmul.f32 %v143, %v1306
    %v1452 = vmul.f32 %v144, %v1306
    %v1453 = vmul.f32 %v145, %v1310
    %v1454 = vmul.f32 %v146, %v1310
    %v1455 = vmul.f32 %v147, %v1314
    %v1456 = vmul.f32 %v148, %v1314
    %v1457 = vmul.f32 %v149, %v1318
    %v1458 = vmul.f32 %v150, %v1318
    %v1459 = vmul.f32 %v151, %v1322
    %v1460 = vmul.f32 %v152, %v1322
    %v1461 = vmul.f32 %v153, %v1326
    %v1462 = vmul.f32 %v154, %v1326
    %v1463 = vmul.f32 %v155, %v1330
    %v1464 = vmul.f32 %v156, %v1330
    %v1465 = vmul.f32 %v157, %v1334
    %v1466 = vmul.f32 %v158, %v1334
    %v1467 = vmul.f32 %v159, %v1338
    %v1468 = vmul.f32 %v160, %v1338
    %v1469 = vmul.f32 %v161, %v1342
    %v1470 = vmul.f32 %v162, %v1342
    %1471 = vst [vmem:[#allocation5] sm:$0xff] %v1343
    %1472 = vst [vmem:[#allocation5 + $0x8] sm:$0xff] %v1344
    %1473 = vst [vmem:[#allocation5 + $0x10] sm:$0xff] %v1345
    %1474 = vst [vmem:[#allocation5 + $0x18] sm:$0xff] %v1346
    %1475 = vst [vmem:[#allocation5 + $0x20] sm:$0xff] %v1347
    %1476 = vst [vmem:[#allocation5 + $0x28] sm:$0xff] %v1348
    %1477 = vst [vmem:[#allocation5 + $0x30] sm:$0xff] %v1349
    %1478 = vst [vmem:[#allocation5 + $0x38] sm:$0xff] %v1350
    %1479 = vst [vmem:[#allocation5 + $0x40] sm:$0xff] %v1351
    %1480 = vst [vmem:[#allocation5 + $0x48] sm:$0xff] %v1352
    %1481 = vst [vmem:[#allocation5 + $0x50] sm:$0xff] %v1353
    %1482 = vst [vmem:[#allocation5 + $0x58] sm:$0xff] %v1354
    %1483 = vst [vmem:[#allocation5 + $0x60] sm:$0xff] %v1355
    %1484 = vst [vmem:[#allocation5 + $0x68] sm:$0xff] %v1356
    %1485 = vst [vmem:[#allocation5 + $0x70] sm:$0xff] %v1357
    %1486 = vst [vmem:[#allocation5 + $0x78] sm:$0xff] %v1358
    %1487 = vst [vmem:[#allocation5 + $0x80] sm:$0xff] %v1359
    %1488 = vst [vmem:[#allocation5 + $0x88] sm:$0xff] %v1360
    %1489 = vst [vmem:[#allocation5 + $0x90] sm:$0xff] %v1361
    %1490 = vst [vmem:[#allocation5 + $0x98] sm:$0xff] %v1362
    %1491 = vst [vmem:[#allocation5 + $0xa0] sm:$0xff] %v1363
    %1492 = vst [vmem:[#allocation5 + $0xa8] sm:$0xff] %v1364
    %1493 = vst [vmem:[#allocation5 + $0xb0] sm:$0xff] %v1365
    %1494 = vst [vmem:[#allocation5 + $0xb8] sm:$0xff] %v1366
    %1495 = vst [vmem:[#allocation5 + $0xc0] sm:$0xff] %v1367
    %1496 = vst [vmem:[#allocation5 + $0xc8] sm:$0xff] %v1368
    %1497 = vst [vmem:[#allocation5 + $0xd0] sm:$0xff] %v1369
    %1498 = vst [vmem:[#allocation5 + $0xd8] sm:$0xff] %v1370
    %1499 = vst [vmem:[#allocation5 + $0xe0] sm:$0xff] %v1371
    %1500 = vst [vmem:[#allocation5 + $0xe8] sm:$0xff] %v1372
    %1501 = vst [vmem:[#allocation5 + $0xf0] sm:$0xff] %v1373
    %1502 = vst [vmem:[#allocation5 + $0xf8] sm:$0xff] %v1374
    %1503 = vst [vmem:[#allocation5 + $0x100] sm:$0xff] %v1375
    %1504 = vst [vmem:[#allocation5 + $0x108] sm:$0xff] %v1376
    %1505 = vst [vmem:[#allocation5 + $0x110] sm:$0xff] %v1377
    %1506 = vst [vmem:[#allocation5 + $0x118] sm:$0xff] %v1378
    %1507 = vst [vmem:[#allocation5 + $0x120] sm:$0xff] %v1379
    %1508 = vst [vmem:[#allocation5 + $0x128] sm:$0xff] %v1380
    %1509 = vst [vmem:[#allocation5 + $0x130] sm:$0xff] %v1381
    %1510 = vst [vmem:[#allocation5 + $0x138] sm:$0xff] %v1382
    %1511 = vst [vmem:[#allocation5 + $0x140] sm:$0xff] %v1383
    %1512 = vst [vmem:[#allocation5 + $0x148] sm:$0xff] %v1384
    %1513 = vst [vmem:[#allocation5 + $0x150] sm:$0xff] %v1385
    %1514 = vst [vmem:[#allocation5 + $0x158] sm:$0xff] %v1386
    %1515 = vst [vmem:[#allocation5 + $0x160] sm:$0xff] %v1387
    %1516 = vst [vmem:[#allocation5 + $0x168] sm:$0xff] %v1388
    %1517 = vst [vmem:[#allocation5 + $0x170] sm:$0xff] %v1389
    %1518 = vst [vmem:[#allocation5 + $0x178] sm:$0xff] %v1390
    %1519 = vst [vmem:[#allocation5 + $0x180] sm:$0xff] %v1391
    %1520 = vst [vmem:[#allocation5 + $0x188] sm:$0xff] %v1392
    %1521 = vst [vmem:[#allocation5 + $0x190] sm:$0xff] %v1393
    %1522 = vst [vmem:[#allocation5 + $0x198] sm:$0xff] %v1394
    %1523 = vst [vmem:[#allocation5 + $0x1a0] sm:$0xff] %v1395
    %1524 = vst [vmem:[#allocation5 + $0x1a8] sm:$0xff] %v1396
    %1525 = vst [vmem:[#allocation5 + $0x1b0] sm:$0xff] %v1397
    %1526 = vst [vmem:[#allocation5 + $0x1b8] sm:$0xff] %v1398
    %1527 = vst [vmem:[#allocation5 + $0x1c0] sm:$0xff] %v1399
    %1528 = vst [vmem:[#allocation5 + $0x1c8] sm:$0xff] %v1400
    %1529 = vst [vmem:[#allocation5 + $0x1d0] sm:$0xff] %v1401
    %1530 = vst [vmem:[#allocation5 + $0x1d8] sm:$0xff] %v1402
    %1531 = vst [vmem:[#allocation5 + $0x1e0] sm:$0xff] %v1403
    %1532 = vst [vmem:[#allocation5 + $0x1e8] sm:$0xff] %v1404
    %1533 = vst [vmem:[#allocation5 + $0x1f0] sm:$0xff] %v1405
    %1534 = vst [vmem:[#allocation5 + $0x1f8] sm:$0xff] %v1406
    %1535 = vst [vmem:[#allocation5 + $0x200] sm:$0xff] %v1407
    %1536 = vst [vmem:[#allocation5 + $0x208] sm:$0xff] %v1408
    %1537 = vst [vmem:[#allocation5 + $0x210] sm:$0xff] %v1409
    %1538 = vst [vmem:[#allocation5 + $0x218] sm:$0xff] %v1410
    %1539 = vst [vmem:[#allocation5 + $0x220] sm:$0xff] %v1411
    %1540 = vst [vmem:[#allocation5 + $0x228] sm:$0xff] %v1412
    %1541 = vst [vmem:[#allocation5 + $0x230] sm:$0xff] %v1413
    %1542 = vst [vmem:[#allocation5 + $0x238] sm:$0xff] %v1414
    %1543 = vst [vmem:[#allocation5 + $0x240] sm:$0xff] %v1415
    %1544 = vst [vmem:[#allocation5 + $0x248] sm:$0xff] %v1416
    %1545 = vst [vmem:[#allocation5 + $0x250] sm:$0xff] %v1417
    %1546 = vst [vmem:[#allocation5 + $0x258] sm:$0xff] %v1418
    %1547 = vst [vmem:[#allocation5 + $0x260] sm:$0xff] %v1419
    %1548 = vst [vmem:[#allocation5 + $0x268] sm:$0xff] %v1420
    %1549 = vst [vmem:[#allocation5 + $0x270] sm:$0xff] %v1421
    %1550 = vst [vmem:[#allocation5 + $0x278] sm:$0xff] %v1422
    %1551 = vst [vmem:[#allocation5 + $0x280] sm:$0xff] %v1423
    %1552 = vst [vmem:[#allocation5 + $0x288] sm:$0xff] %v1424
    %1553 = vst [vmem:[#allocation5 + $0x290] sm:$0xff] %v1425
    %1554 = vst [vmem:[#allocation5 + $0x298] sm:$0xff] %v1426
    %1555 = vst [vmem:[#allocation5 + $0x2a0] sm:$0xff] %v1427
    %1556 = vst [vmem:[#allocation5 + $0x2a8] sm:$0xff] %v1428
    %1557 = vst [vmem:[#allocation5 + $0x2b0] sm:$0xff] %v1429
    %1558 = vst [vmem:[#allocation5 + $0x2b8] sm:$0xff] %v1430
    %1559 = vst [vmem:[#allocation5 + $0x2c0] sm:$0xff] %v1431
    %1560 = vst [vmem:[#allocation5 + $0x2c8] sm:$0xff] %v1432
    %1561 = vst [vmem:[#allocation5 + $0x2d0] sm:$0xff] %v1433
    %1562 = vst [vmem:[#allocation5 + $0x2d8] sm:$0xff] %v1434
    %1563 = vst [vmem:[#allocation5 + $0x2e0] sm:$0xff] %v1435
    %1564 = vst [vmem:[#allocation5 + $0x2e8] sm:$0xff] %v1436
    %1565 = vst [vmem:[#allocation5 + $0x2f0] sm:$0xff] %v1437
    %1566 = vst [vmem:[#allocation5 + $0x2f8] sm:$0xff] %v1438
    %1567 = vst [vmem:[#allocation5 + $0x300] sm:$0xff] %v1439
    %1568 = vst [vmem:[#allocation5 + $0x308] sm:$0xff] %v1440
    %1569 = vst [vmem:[#allocation5 + $0x310] sm:$0xff] %v1441
    %1570 = vst [vmem:[#allocation5 + $0x318] sm:$0xff] %v1442
    %1571 = vst [vmem:[#allocation5 + $0x320] sm:$0xff] %v1443
    %1572 = vst [vmem:[#allocation5 + $0x328] sm:$0xff] %v1444
    %1573 = vst [vmem:[#allocation5 + $0x330] sm:$0xff] %v1445
    %1574 = vst [vmem:[#allocation5 + $0x338] sm:$0xff] %v1446
    %1575 = vst [vmem:[#allocation5 + $0x340] sm:$0xff] %v1447
    %1576 = vst [vmem:[#allocation5 + $0x348] sm:$0xff] %v1448
    %1577 = vst [vmem:[#allocation5 + $0x350] sm:$0xff] %v1449
    %1578 = vst [vmem:[#allocation5 + $0x358] sm:$0xff] %v1450
    %1579 = vst [vmem:[#allocation5 + $0x360] sm:$0xff] %v1451
    %1580 = vst [vmem:[#allocation5 + $0x368] sm:$0xff] %v1452
    %1581 = vst [vmem:[#allocation5 + $0x370] sm:$0xff] %v1453
    %1582 = vst [vmem:[#allocation5 + $0x378] sm:$0xff] %v1454
    %1583 = vst [vmem:[#allocation5 + $0x380] sm:$0xff] %v1455
    %1584 = vst [vmem:[#allocation5 + $0x388] sm:$0xff] %v1456
    %1585 = vst [vmem:[#allocation5 + $0x390] sm:$0xff] %v1457
    %1586 = vst [vmem:[#allocation5 + $0x398] sm:$0xff] %v1458
    %1587 = vst [vmem:[#allocation5 + $0x3a0] sm:$0xff] %v1459
    %1588 = vst [vmem:[#allocation5 + $0x3a8] sm:$0xff] %v1460
    %1589 = vst [vmem:[#allocation5 + $0x3b0] sm:$0xff] %v1461
    %1590 = vst [vmem:[#allocation5 + $0x3b8] sm:$0xff] %v1462
    %1591 = vst [vmem:[#allocation5 + $0x3c0] sm:$0xff] %v1463
    %1592 = vst [vmem:[#allocation5 + $0x3c8] sm:$0xff] %v1464
    %1593 = vst [vmem:[#allocation5 + $0x3d0] sm:$0xff] %v1465
    %1594 = vst [vmem:[#allocation5 + $0x3d8] sm:$0xff] %v1466
    %1595 = vst [vmem:[#allocation5 + $0x3e0] sm:$0xff] %v1467
    %1596 = vst [vmem:[#allocation5 + $0x3e8] sm:$0xff] %v1468
    %1597 = vst [vmem:[#allocation5 + $0x3f0] sm:$0xff] %v1469
    %1598 = vst [vmem:[#allocation5 + $0x3f8] sm:$0xff] %v1470
    // Predicated region
    $region26: #{tpu_custom_call.1} parent=1 // pred_check
      _
    $region27: #{tpu_custom_call.1} parent=1 // pred_check_branch
      %1600 = sbr.rel (0) target = $region29
    $region28: #{tpu_custom_call.1} parent=1 // pred_region
      %s1602 = ssub.s32 16384, 16384
      %1603 = vsyncadd [#allocation4], %s1602
      %s1604 = sshll.u32 [#allocation5], 4
      %s1605 = int_to_ptr.vmem [resolvable:$true] %s1604
      %1610 = dma.vmem_to_hbm [thread:$0]  %s1605, 16384, %s5, [#allocation4], 256, 256, 16
    $region29: #{tpu_custom_call.1} parent=1 // pred_fallthru
      _
    // Predicated region
    $region30: #{tpu_custom_call.1} parent=1 // pred_check
      _
    $region31: #{tpu_custom_call.1} parent=1 // pred_check_branch
      %1612 = sbr.rel (0) target = $region33
    $region32: #{tpu_custom_call.1} parent=1 // pred_region
      %1613 = dma.done [#allocation4], 16384
    $region33: #{tpu_custom_call.1} parent=1 // pred_fallthru
      _
    %1614 = vsyncpa [#allocation3], 1
    %1615 = vsyncpa [#allocation4], 1

</llo_original>
